<compile_context>
chip_gen: v7x
topology: tpu7x:2x2x1
jax: 0.10.0
libtpu: 0.0.40
codegen_flags: <defaults>
</compile_context>

<pallas_src>
import functools

import jax
import jax.numpy as jnp
from jax import lax
from jax.experimental import pallas as pl
from jax.experimental.pallas import tpu as pltpu

NEG_SLOPE = 0.01   # nn.LeakyReLU default negative_slope
BN_EPS = 1e-5      # nn.BatchNorm2d default eps


def _leaky(x):
    return jnp.where(x > 0, x, NEG_SLOPE * x)


def _resblock_kernel(*refs, H, W, Cin, Cm, Cout, ksize, stride, use_downsample):
    if use_downsample:
        (x_ref, w1_ref, s1_ref, b1_ref, w2_ref, s2_ref, b2_ref,
         w3_ref, s3_ref, b3_ref, wd_ref, sd_ref, bd_ref, o_ref) = refs
    else:
        (x_ref, w1_ref, s1_ref, b1_ref, w2_ref, s2_ref, b2_ref,
         w3_ref, s3_ref, b3_ref, o_ref) = refs

    Ho = (H + 2 - ksize) // stride + 1
    Wo = (W + 2 - ksize) // stride + 1
    WoCm = Wo * Cm

    x = x_ref[0]                                          # (H, W*Cin) f32, lane-dense

    # ---- conv1 (1x1) + bn1 + leaky: one block-diagonal matmul ----
    t1 = jnp.dot(x.astype(jnp.bfloat16), w1_ref[...],
                 preferred_element_type=jnp.float32)      # (H, W*Cm)
    t1 = _leaky(t1 * s1_ref[...] + b1_ref[...])

    # ---- conv2 (ksize x ksize, stride, pad=1) ----
    # One matmul against the block-banded weight (W taps + W zero-padding folded
    # into the weight); the ksize H-taps are cheap row-shifted adds.
    c_all = jnp.dot(t1.astype(jnp.bfloat16), w2_ref[...],
                    preferred_element_type=jnp.float32)   # (H, ksize*Wo*Cm)
    zero_row = jnp.zeros((1, WoCm), jnp.float32)
    acc = jnp.zeros((Ho, WoCm), jnp.float32)
    for kh in range(ksize):
        c_kh = c_all[:, kh * WoCm:(kh + 1) * WoCm]        # lane-aligned slice
        c_pad = jnp.concatenate([zero_row, c_kh, zero_row], axis=0)  # H halo
        acc = acc + lax.slice(c_pad, (kh, 0),
                              ((Ho - 1) * stride + kh + 1, WoCm),
                              (stride, 1))                # rows ho*stride + kh - 1
    t2 = _leaky(acc * s2_ref[...] + b2_ref[...])          # (Ho, Wo*Cm)

    # ---- conv3 (1x1) + bn3: one block-diagonal matmul ----
    t3 = jnp.dot(t2.astype(jnp.bfloat16), w3_ref[...],
                 preferred_element_type=jnp.float32)      # (Ho, Wo*Cout)
    t3 = t3 * s3_ref[...] + b3_ref[...]

    # ---- skip path ----
    if use_downsample:
        xs = lax.slice(x, (0, 0), ((Ho - 1) * stride + 1, W * Cin), (stride, 1))
        skip = jnp.dot(xs.astype(jnp.bfloat16), wd_ref[...],
                       preferred_element_type=jnp.float32)
        skip = skip * sd_ref[...] + bd_ref[...]
    else:
        # Identity skip (Cin == Cout): row layouts coincide when stride == 1.
        # TODO(synk): stride>1 without downsample has no valid identity skip
        #             (the original PyTorch module would fail there too).
        skip = x

    o_ref[0] = _leaky(t3 + skip)                          # (Ho, Wo*Cout) unmasked store


def _build_kernel_weights(p, *, H, W, ksize, stride, use_downsample):
    """Fold the convs into lane-dense block-diagonal / block-banded matmul weights."""
    Cin, Cm = p["w1"].shape
    Cout = p["w3"].shape[1]
    Wo = (W + 2 - ksize) // stride + 1
    f32 = jnp.float32

    # conv1 (1x1): block-diagonal (W*Cin, W*Cm)
    w1_big = jnp.einsum("uv,ic->uivc", jnp.eye(W, dtype=f32),
                        p["w1"]).reshape(W * Cin, W * Cm)
    # conv3 (1x1): block-diagonal (Wo*Cm, Wo*Cout)
    w3_big = jnp.einsum("uv,ic->uivc", jnp.eye(Wo, dtype=f32),
                        p["w3"]).reshape(Wo * Cm, Wo * Cout)
    # conv2: block-banded per kh (W taps + padding=1 folded in), concatenated over kh.
    w_idx = jnp.arange(W)[:, None]                        # (W, 1)
    wo_idx = jnp.arange(Wo)[None, :]                      # (1, Wo)
    kw_idx = w_idx - wo_idx * stride + 1                  # padding = 1
    valid = (kw_idx >= 0) & (kw_idx < ksize)
    kw_cl = jnp.clip(kw_idx, 0, ksize - 1)
    bands = []
    for kh in range(ksize):
        g = p["w2"][kh][kw_cl]                            # (W, Wo, Cm, Cm)
        g = jnp.where(valid[:, :, None, None], g, 0.0)
        bands.append(jnp.transpose(g, (0, 2, 1, 3)).reshape(W * Cm, Wo * Cm))
    w2_big = jnp.concatenate(bands, axis=1)               # (W*Cm, ksize*Wo*Cm)

    def tile(v, reps):
        return jnp.tile(v, reps)[None, :].astype(f32)

    out = dict(
        w1=w1_big.astype(jnp.bfloat16),
        w2=w2_big.astype(jnp.bfloat16),
        w3=w3_big.astype(jnp.bfloat16),
        s1=tile(p["s1"], W), b1=tile(p["b1"], W),
        s2=tile(p["s2"], Wo), b2=tile(p["b2"], Wo),
        s3=tile(p["s3"], Wo), b3=tile(p["b3"], Wo),
    )
    if use_downsample:
        sel = (w_idx == wo_idx * stride).astype(f32)      # (W, Wo) strided 1x1 taps
        wd_big = jnp.einsum("uv,ic->uivc", sel,
                            p["wd"]).reshape(W * Cin, Wo * Cout)
        out.update(wd=wd_big.astype(jnp.bfloat16),
                   sd=tile(p["sd"], Wo), bd=tile(p["bd"], Wo))
    return out


def resblock_forward(x_nhwc, p, *, ksize, stride, use_downsample):
    N, H, W, Cin = x_nhwc.shape
    Cm = p["w1"].shape[1]
    Cout = p["w3"].shape[1]
    Ho = (H + 2 - ksize) // stride + 1
    Wo = (W + 2 - ksize) // stride + 1

    kp = _build_kernel_weights(p, H=H, W=W, ksize=ksize, stride=stride,
                               use_downsample=use_downsample)
    x_rows = x_nhwc.reshape(N, H, W * Cin)                # lane-dense input slab

    kernel = functools.partial(
        _resblock_kernel, H=H, W=W, Cin=Cin, Cm=Cm, Cout=Cout,
        ksize=ksize, stride=stride, use_downsample=use_downsample)

    def const_spec(a):
        nd = a.ndim
        return pl.BlockSpec(a.shape, lambda n, _nd=nd: (0,) * _nd)

    names = ["w1", "s1", "b1", "w2", "s2", "b2", "w3", "s3", "b3"]
    if use_downsample:
        names += ["wd", "sd", "bd"]
    w_args = [kp[k] for k in names]
    in_specs = ([pl.BlockSpec((1, H, W * Cin), lambda n: (n, 0, 0))]
                + [const_spec(a) for a in w_args])

    out_rows = pl.pallas_call(
        kernel,
        out_shape=jax.ShapeDtypeStruct((N, Ho, Wo * Cout), jnp.float32),
        grid_spec=pltpu.PrefetchScalarGridSpec(
            num_scalar_prefetch=0,
            grid=(N,),
            in_specs=in_specs,
            out_specs=pl.BlockSpec((1, Ho, Wo * Cout), lambda n: (n, 0, 0)),
        ),
        compiler_params=pltpu.CompilerParams(
            dimension_semantics=("parallel",)),        # v7x: batch across both TCs
    )(x_rows, *w_args)
    return out_rows.reshape(N, Ho, Wo, Cout)


def _fold_bn(gamma, beta, mean, var):
    scale = gamma / jnp.sqrt(var + BN_EPS)
    return scale, beta - mean * scale


def init_params(key, in_channels, out_channels, ksize):
    Cm = out_channels // 4   # expansion = 4
    ks = jax.random.split(key, 8)

    def bn(k, c):
        k1, k2, k3, k4 = jax.random.split(k, 4)
        gamma = 1.0 + 0.1 * jax.random.normal(k1, (c,))
        beta = 0.1 * jax.random.normal(k2, (c,))
        mean = 0.1 * jax.random.normal(k3, (c,))
        var = jax.random.uniform(k4, (c,), minval=0.5, maxval=1.5)
        return _fold_bn(gamma, beta, mean, var)

    s1, b1 = bn(ks[0], Cm)
    s2, b2 = bn(ks[1], Cm)
    s3, b3 = bn(ks[2], out_channels)
    sd, bd = bn(ks[3], out_channels)
    p = dict(
        w1=0.2 * jax.random.normal(ks[4], (in_channels, Cm)),
        w2=0.1 * jax.random.normal(ks[5], (ksize, ksize, Cm, Cm)),
        w3=0.2 * jax.random.normal(ks[6], (Cm, out_channels)),
        wd=0.2 * jax.random.normal(ks[7], (in_channels, out_channels)),
        s1=s1, b1=b1, s2=s2, b2=b2, s3=s3, b3=b3, sd=sd, bd=bd)
    return jax.tree.map(lambda a: a.astype(jnp.float32), p)


def ref_forward(x, p, *, ksize, stride, use_downsample, conv_dtype=jnp.float32):
    """Pure-JAX NHWC reference (eval-mode BN folded the same way)."""
    dn = ("NHWC", "HWIO", "NHWC")

    def conv(v, w, s, pad):
        return lax.conv_general_dilated(
            v.astype(conv_dtype), w.astype(conv_dtype), (s, s), pad,
            dimension_numbers=dn, preferred_element_type=jnp.float32)

    Cin, Cm = p["w1"].shape
    Cout = p["w3"].shape[1]
    w1 = p["w1"].reshape(1, 1, Cin, Cm)
    w3 = p["w3"].reshape(1, 1, Cm, Cout)
    wd = p["wd"].reshape(1, 1, Cin, Cout)

    out = conv(x, w1, 1, "VALID")
    out = _leaky(out * p["s1"] + p["b1"])
    out = conv(out, p["w2"], stride, [(1, 1), (1, 1)])
    out = _leaky(out * p["s2"] + p["b2"])
    out = conv(out, w3, 1, "VALID")
    out = out * p["s3"] + p["b3"]
    skip = x
    if use_downsample:
        skip = conv(x, wd, stride, "VALID")
        skip = skip * p["sd"] + p["bd"]
    return _leaky(out + skip)


if __name__ == "__main__":
    in_channels, out_channels, ksize, stride = 16, 32, 3, 1
    N, H, W = 2, 16, 16

    key = jax.random.PRNGKey(0)
    kx, kparam = jax.random.split(key)
    x = jax.random.normal(kx, (N, H, W, in_channels), jnp.float32)  # NHWC input
    p = init_params(kparam, in_channels, out_channels, ksize)
    use_downsample = in_channels != out_channels   # matches module's is_downsample

    out = resblock_forward(x, p, ksize=ksize, stride=stride,
                           use_downsample=use_downsample)
    out = jax.block_until_ready(out)

    # Tight check: reference using the same bf16 MXU operand precision (isolates
    # layout / indexing bugs).  Loose check: full-f32 reference (bounds the
    # intentional bf16 quantization of the matmul operands).
    ref_bf16 = ref_forward(x, p, ksize=ksize, stride=stride,
                           use_downsample=use_downsample,
                           conv_dtype=jnp.bfloat16)
    ref_f32 = ref_forward(x, p, ksize=ksize, stride=stride,
                          use_downsample=use_downsample)
    assert out.shape == ref_f32.shape, (out.shape, ref_f32.shape)
    err_tight = float(jnp.max(jnp.abs(out - ref_bf16)))
    err_loose = float(jnp.max(jnp.abs(out - ref_f32)))
    assert err_tight < 2e-2, f"max abs error vs bf16-matched reference {err_tight}"
    assert err_loose < 1.5e-1, f"max abs error vs f32 reference {err_loose}"
    print("KERNEL_OK")
</pallas_src>

<mosaic_0001>
module attributes {stable_mosaic.version = 11 : i64} {
  func.func @_resblock_kernel(%arg0: i32, %arg1: memref<1x16x256xf32, #tpu.memory_space<vmem>>, %arg2: memref<256x128xbf16, #tpu.memory_space<vmem>>, %arg3: memref<1x128xf32, #tpu.memory_space<vmem>>, %arg4: memref<1x128xf32, #tpu.memory_space<vmem>>, %arg5: memref<128x384xbf16, #tpu.memory_space<vmem>>, %arg6: memref<1x128xf32, #tpu.memory_space<vmem>>, %arg7: memref<1x128xf32, #tpu.memory_space<vmem>>, %arg8: memref<128x512xbf16, #tpu.memory_space<vmem>>, %arg9: memref<1x512xf32, #tpu.memory_space<vmem>>, %arg10: memref<1x512xf32, #tpu.memory_space<vmem>>, %arg11: memref<256x512xbf16, #tpu.memory_space<vmem>>, %arg12: memref<1x512xf32, #tpu.memory_space<vmem>>, %arg13: memref<1x512xf32, #tpu.memory_space<vmem>>, %arg14: memref<1x16x512xf32, #tpu.memory_space<vmem>>) attributes {dimension_semantics = [#tpu.dimension_semantics<parallel>], iteration_bounds = array<i64: 2>, scalar_prefetch = 0 : i64, scratch_operands = 0 : i64, tpu.core_type = #tpu.core_type<tc>, window_params = [{transform_indices = @transform_0, window_bounds = array<i64: 1, 16, 256>}, {pipeline_mode = #tpu.pipeline_mode<synchronous>, transform_indices = @transform_1, window_bounds = array<i64: 256, 128>}, {pipeline_mode = #tpu.pipeline_mode<synchronous>, transform_indices = @transform_2, window_bounds = array<i64: 1, 128>}, {pipeline_mode = #tpu.pipeline_mode<synchronous>, transform_indices = @transform_3, window_bounds = array<i64: 1, 128>}, {pipeline_mode = #tpu.pipeline_mode<synchronous>, transform_indices = @transform_4, window_bounds = array<i64: 128, 384>}, {pipeline_mode = #tpu.pipeline_mode<synchronous>, transform_indices = @transform_5, window_bounds = array<i64: 1, 128>}, {pipeline_mode = #tpu.pipeline_mode<synchronous>, transform_indices = @transform_6, window_bounds = array<i64: 1, 128>}, {pipeline_mode = #tpu.pipeline_mode<synchronous>, transform_indices = @transform_7, window_bounds = array<i64: 128, 512>}, {pipeline_mode = #tpu.pipeline_mode<synchronous>, transform_indices = @transform_8, window_bounds = array<i64: 1, 512>}, {pipeline_mode = #tpu.pipeline_mode<synchronous>, transform_indices = @transform_9, window_bounds = array<i64: 1, 512>}, {pipeline_mode = #tpu.pipeline_mode<synchronous>, transform_indices = @transform_10, window_bounds = array<i64: 256, 512>}, {pipeline_mode = #tpu.pipeline_mode<synchronous>, transform_indices = @transform_11, window_bounds = array<i64: 1, 512>}, {pipeline_mode = #tpu.pipeline_mode<synchronous>, transform_indices = @transform_12, window_bounds = array<i64: 1, 512>}, {transform_indices = @transform_13, window_bounds = array<i64: 1, 16, 512>}]} {
    %c0 = arith.constant 0 : index
    %c0_0 = arith.constant 0 : index
    %c0_1 = arith.constant 0 : index
    %0 = vector.load %arg1[%c0, %c0_0, %c0_1] : memref<1x16x256xf32, #tpu.memory_space<vmem>>, vector<1x16x256xf32>
    %1 = vector.shape_cast %0 : vector<1x16x256xf32> to vector<16x256xf32>
    %2 = arith.truncf %1 : vector<16x256xf32> to vector<16x256xbf16>
    %c0_2 = arith.constant 0 : index
    %c0_3 = arith.constant 0 : index
    %3 = vector.load %arg2[%c0_2, %c0_3] : memref<256x128xbf16, #tpu.memory_space<vmem>>, vector<256x128xbf16>
    %cst = arith.constant dense<0.000000e+00> : vector<16x128xf32>
    %4 = tpu.matmul %2, %3, %cst {dimension_numbers = #tpu.dot_dimension_numbers<[1], [0], [0], [1], [0, 0, 1, 1], [], []>} : vector<16x256xbf16>, vector<256x128xbf16>, vector<16x128xf32> -> vector<16x128xf32>
    %c0_4 = arith.constant 0 : index
    %c0_5 = arith.constant 0 : index
    %5 = vector.load %arg3[%c0_4, %c0_5] : memref<1x128xf32, #tpu.memory_space<vmem>>, vector<1x128xf32>
    %6 = vector.broadcast %5 : vector<1x128xf32> to vector<16x128xf32>
    %7 = arith.mulf %4, %6 : vector<16x128xf32>
    %c0_6 = arith.constant 0 : index
    %c0_7 = arith.constant 0 : index
    %8 = vector.load %arg4[%c0_6, %c0_7] : memref<1x128xf32, #tpu.memory_space<vmem>>, vector<1x128xf32>
    %9 = vector.broadcast %8 : vector<1x128xf32> to vector<16x128xf32>
    %10 = arith.addf %7, %9 : vector<16x128xf32>
    %cst_8 = arith.constant 0.000000e+00 : f32
    %11 = vector.broadcast %cst_8 : f32 to vector<16x128xf32>
    %12 = arith.cmpf ogt, %10, %11 : vector<16x128xf32>
    %cst_9 = arith.constant 0.00999999977 : f32
    %13 = vector.broadcast %cst_9 : f32 to vector<16x128xf32>
    %14 = arith.mulf %13, %10 : vector<16x128xf32>
    %15 = arith.select %12, %10, %14 : vector<16x128xi1>, vector<16x128xf32>
    %16 = arith.truncf %15 : vector<16x128xf32> to vector<16x128xbf16>
    %c0_10 = arith.constant 0 : index
    %c0_11 = arith.constant 0 : index
    %17 = vector.load %arg5[%c0_10, %c0_11] : memref<128x384xbf16, #tpu.memory_space<vmem>>, vector<128x384xbf16>
    %cst_12 = arith.constant dense<0.000000e+00> : vector<16x384xf32>
    %18 = tpu.matmul %16, %17, %cst_12 {dimension_numbers = #tpu.dot_dimension_numbers<[1], [0], [0], [1], [0, 0, 1, 1], [], []>} : vector<16x128xbf16>, vector<128x384xbf16>, vector<16x384xf32> -> vector<16x384xf32>
    %cst_13 = arith.constant 0.000000e+00 : f32
    %19 = vector.broadcast %cst_13 : f32 to vector<1x128xf32>
    %cst_14 = arith.constant 0.000000e+00 : f32
    %20 = vector.broadcast %cst_14 : f32 to vector<16x128xf32>
    %21 = vector.extract_strided_slice %18 {offsets = [0, 0], sizes = [16, 128], strides = [1, 1]} : vector<16x384xf32> to vector<16x128xf32>
    %22 = tpu.concatenate %19, %21, %19 in 0 : vector<1x128xf32>, vector<16x128xf32>, vector<1x128xf32> -> vector<18x128xf32>
    %23 = vector.extract_strided_slice %22 {offsets = [0, 0], sizes = [16, 128], strides = [1, 1]} : vector<18x128xf32> to vector<16x128xf32>
    %24 = arith.addf %20, %23 : vector<16x128xf32>
    %25 = vector.extract_strided_slice %18 {offsets = [0, 128], sizes = [16, 128], strides = [1, 1]} : vector<16x384xf32> to vector<16x128xf32>
    %26 = tpu.concatenate %19, %25, %19 in 0 : vector<1x128xf32>, vector<16x128xf32>, vector<1x128xf32> -> vector<18x128xf32>
    %27 = vector.extract_strided_slice %26 {offsets = [1, 0], sizes = [16, 128], strides = [1, 1]} : vector<18x128xf32> to vector<16x128xf32>
    %28 = arith.addf %24, %27 : vector<16x128xf32>
    %29 = vector.extract_strided_slice %18 {offsets = [0, 256], sizes = [16, 128], strides = [1, 1]} : vector<16x384xf32> to vector<16x128xf32>
    %30 = tpu.concatenate %19, %29, %19 in 0 : vector<1x128xf32>, vector<16x128xf32>, vector<1x128xf32> -> vector<18x128xf32>
    %31 = vector.extract_strided_slice %30 {offsets = [2, 0], sizes = [16, 128], strides = [1, 1]} : vector<18x128xf32> to vector<16x128xf32>
    %32 = arith.addf %28, %31 : vector<16x128xf32>
    %c0_15 = arith.constant 0 : index
    %c0_16 = arith.constant 0 : index
    %33 = vector.load %arg6[%c0_15, %c0_16] : memref<1x128xf32, #tpu.memory_space<vmem>>, vector<1x128xf32>
    %34 = vector.broadcast %33 : vector<1x128xf32> to vector<16x128xf32>
    %35 = arith.mulf %32, %34 : vector<16x128xf32>
    %c0_17 = arith.constant 0 : index
    %c0_18 = arith.constant 0 : index
    %36 = vector.load %arg7[%c0_17, %c0_18] : memref<1x128xf32, #tpu.memory_space<vmem>>, vector<1x128xf32>
    %37 = vector.broadcast %36 : vector<1x128xf32> to vector<16x128xf32>
    %38 = arith.addf %35, %37 : vector<16x128xf32>
    %cst_19 = arith.constant 0.000000e+00 : f32
    %39 = vector.broadcast %cst_19 : f32 to vector<16x128xf32>
    %40 = arith.cmpf ogt, %38, %39 : vector<16x128xf32>
    %cst_20 = arith.constant 0.00999999977 : f32
    %41 = vector.broadcast %cst_20 : f32 to vector<16x128xf32>
    %42 = arith.mulf %41, %38 : vector<16x128xf32>
    %43 = arith.select %40, %38, %42 : vector<16x128xi1>, vector<16x128xf32>
    %44 = arith.truncf %43 : vector<16x128xf32> to vector<16x128xbf16>
    %c0_21 = arith.constant 0 : index
    %c0_22 = arith.constant 0 : index
    %45 = vector.load %arg8[%c0_21, %c0_22] : memref<128x512xbf16, #tpu.memory_space<vmem>>, vector<128x512xbf16>
    %cst_23 = arith.constant dense<0.000000e+00> : vector<16x512xf32>
    %46 = tpu.matmul %44, %45, %cst_23 {dimension_numbers = #tpu.dot_dimension_numbers<[1], [0], [0], [1], [0, 0, 1, 1], [], []>} : vector<16x128xbf16>, vector<128x512xbf16>, vector<16x512xf32> -> vector<16x512xf32>
    %c0_24 = arith.constant 0 : index
    %c0_25 = arith.constant 0 : index
    %47 = vector.load %arg9[%c0_24, %c0_25] : memref<1x512xf32, #tpu.memory_space<vmem>>, vector<1x512xf32>
    %48 = vector.broadcast %47 : vector<1x512xf32> to vector<16x512xf32>
    %49 = arith.mulf %46, %48 : vector<16x512xf32>
    %c0_26 = arith.constant 0 : index
    %c0_27 = arith.constant 0 : index
    %50 = vector.load %arg10[%c0_26, %c0_27] : memref<1x512xf32, #tpu.memory_space<vmem>>, vector<1x512xf32>
    %51 = vector.broadcast %50 : vector<1x512xf32> to vector<16x512xf32>
    %52 = arith.addf %49, %51 : vector<16x512xf32>
    %53 = vector.extract_strided_slice %1 {offsets = [0, 0], sizes = [16, 256], strides = [1, 1]} : vector<16x256xf32> to vector<16x256xf32>
    %54 = arith.truncf %53 : vector<16x256xf32> to vector<16x256xbf16>
    %c0_28 = arith.constant 0 : index
    %c0_29 = arith.constant 0 : index
    %55 = vector.load %arg11[%c0_28, %c0_29] : memref<256x512xbf16, #tpu.memory_space<vmem>>, vector<256x512xbf16>
    %cst_30 = arith.constant dense<0.000000e+00> : vector<16x512xf32>
    %56 = tpu.matmul %54, %55, %cst_30 {dimension_numbers = #tpu.dot_dimension_numbers<[1], [0], [0], [1], [0, 0, 1, 1], [], []>} : vector<16x256xbf16>, vector<256x512xbf16>, vector<16x512xf32> -> vector<16x512xf32>
    %c0_31 = arith.constant 0 : index
    %c0_32 = arith.constant 0 : index
    %57 = vector.load %arg12[%c0_31, %c0_32] : memref<1x512xf32, #tpu.memory_space<vmem>>, vector<1x512xf32>
    %58 = vector.broadcast %57 : vector<1x512xf32> to vector<16x512xf32>
    %59 = arith.mulf %56, %58 : vector<16x512xf32>
    %c0_33 = arith.constant 0 : index
    %c0_34 = arith.constant 0 : index
    %60 = vector.load %arg13[%c0_33, %c0_34] : memref<1x512xf32, #tpu.memory_space<vmem>>, vector<1x512xf32>
    %61 = vector.broadcast %60 : vector<1x512xf32> to vector<16x512xf32>
    %62 = arith.addf %59, %61 : vector<16x512xf32>
    %63 = arith.addf %52, %62 : vector<16x512xf32>
    %cst_35 = arith.constant 0.000000e+00 : f32
    %64 = vector.broadcast %cst_35 : f32 to vector<16x512xf32>
    %65 = arith.cmpf ogt, %63, %64 : vector<16x512xf32>
    %cst_36 = arith.constant 0.00999999977 : f32
    %66 = vector.broadcast %cst_36 : f32 to vector<16x512xf32>
    %67 = arith.mulf %66, %63 : vector<16x512xf32>
    %68 = arith.select %65, %63, %67 : vector<16x512xi1>, vector<16x512xf32>
    %c0_37 = arith.constant 0 : index
    %c0_38 = arith.constant 0 : index
    %c0_39 = arith.constant 0 : index
    %69 = vector.load %arg14[%c0_37, %c0_38, %c0_39] : memref<1x16x512xf32, #tpu.memory_space<vmem>>, vector<1x16x512xf32>
    %70 = vector.shape_cast %69 : vector<1x16x512xf32> to vector<16x512xf32>
    %71 = vector.shape_cast %68 : vector<16x512xf32> to vector<1x16x512xf32>
    tpu.vector_store %arg14[%c0_37, %c0_38, %c0_39], %71 {strides = array<i32>} : memref<1x16x512xf32, #tpu.memory_space<vmem>>, vector<1x16x512xf32>,
    return
  }
  func.func @transform_0(%arg0: i32) -> (i32, i32, i32) {
    %c0_i32 = arith.constant 0 : i32
    %c0_i32_0 = arith.constant 0 : i32
    %c0_i32_1 = arith.constant 0 : i32
    return %arg0, %c0_i32, %c0_i32_0 : i32, i32, i32
  }
  func.func @transform_1(%arg0: i32) -> (i32, i32) {
    %c0_i32 = arith.constant 0 : i32
    %c0_i32_0 = arith.constant 0 : i32
    %c0_i32_1 = arith.constant 0 : i32
    return %c0_i32, %c0_i32_0 : i32, i32
  }
  func.func @transform_2(%arg0: i32) -> (i32, i32) {
    %c0_i32 = arith.constant 0 : i32
    %c0_i32_0 = arith.constant 0 : i32
    %c0_i32_1 = arith.constant 0 : i32
    return %c0_i32, %c0_i32_0 : i32, i32
  }
  func.func @transform_3(%arg0: i32) -> (i32, i32) {
    %c0_i32 = arith.constant 0 : i32
    %c0_i32_0 = arith.constant 0 : i32
    %c0_i32_1 = arith.constant 0 : i32
    return %c0_i32, %c0_i32_0 : i32, i32
  }
  func.func @transform_4(%arg0: i32) -> (i32, i32) {
    %c0_i32 = arith.constant 0 : i32
    %c0_i32_0 = arith.constant 0 : i32
    %c0_i32_1 = arith.constant 0 : i32
    return %c0_i32, %c0_i32_0 : i32, i32
  }
  func.func @transform_5(%arg0: i32) -> (i32, i32) {
    %c0_i32 = arith.constant 0 : i32
    %c0_i32_0 = arith.constant 0 : i32
    %c0_i32_1 = arith.constant 0 : i32
    return %c0_i32, %c0_i32_0 : i32, i32
  }
  func.func @transform_6(%arg0: i32) -> (i32, i32) {
    %c0_i32 = arith.constant 0 : i32
    %c0_i32_0 = arith.constant 0 : i32
    %c0_i32_1 = arith.constant 0 : i32
    return %c0_i32, %c0_i32_0 : i32, i32
  }
  func.func @transform_7(%arg0: i32) -> (i32, i32) {
    %c0_i32 = arith.constant 0 : i32
    %c0_i32_0 = arith.constant 0 : i32
    %c0_i32_1 = arith.constant 0 : i32
    return %c0_i32, %c0_i32_0 : i32, i32
  }
  func.func @transform_8(%arg0: i32) -> (i32, i32) {
    %c0_i32 = arith.constant 0 : i32
    %c0_i32_0 = arith.constant 0 : i32
    %c0_i32_1 = arith.constant 0 : i32
    return %c0_i32, %c0_i32_0 : i32, i32
  }
  func.func @transform_9(%arg0: i32) -> (i32, i32) {
    %c0_i32 = arith.constant 0 : i32
    %c0_i32_0 = arith.constant 0 : i32
    %c0_i32_1 = arith.constant 0 : i32
    return %c0_i32, %c0_i32_0 : i32, i32
  }
  func.func @transform_10(%arg0: i32) -> (i32, i32) {
    %c0_i32 = arith.constant 0 : i32
    %c0_i32_0 = arith.constant 0 : i32
    %c0_i32_1 = arith.constant 0 : i32
    return %c0_i32, %c0_i32_0 : i32, i32
  }
  func.func @transform_11(%arg0: i32) -> (i32, i32) {
    %c0_i32 = arith.constant 0 : i32
    %c0_i32_0 = arith.constant 0 : i32
    %c0_i32_1 = arith.constant 0 : i32
    return %c0_i32, %c0_i32_0 : i32, i32
  }
  func.func @transform_12(%arg0: i32) -> (i32, i32) {
    %c0_i32 = arith.constant 0 : i32
    %c0_i32_0 = arith.constant 0 : i32
    %c0_i32_1 = arith.constant 0 : i32
    return %c0_i32, %c0_i32_0 : i32, i32
  }
  func.func @transform_13(%arg0: i32) -> (i32, i32, i32) {
    %c0_i32 = arith.constant 0 : i32
    %c0_i32_0 = arith.constant 0 : i32
    %c0_i32_1 = arith.constant 0 : i32
    return %arg0, %c0_i32, %c0_i32_0 : i32, i32, i32
  }
}

</mosaic_0001>

<llo_original>
// kernel: tpu_custom_call.1
$region0: #{tpu_custom_call.1}
  #allocation0 [shape = 'u32[]', space=smem, size = 0x4, offset = 0x4, fixed_abs, tag = 'smem constant byte address 0x4 - core index']
  #allocation1 [shape = 'u32[144,128]{1,0:T(1,128)}', space=vmem, size = 0x12000, scoped, tag = 'internal scratch']
  %s0 = inlined_call_operand.hbm [shape: f32[2,16,256], index: 0, kind: input, shape index: {}]
  %s1 = inlined_call_operand.hbm [shape: bf16[256,128], index: 1, kind: input, shape index: {}]
  %s2 = inlined_call_operand.vmem [shape: f32[1,128], index: 2, kind: input, shape index: {}]
  %s3 = inlined_call_operand.vmem [shape: f32[1,128], index: 3, kind: input, shape index: {}]
  %s4 = inlined_call_operand.hbm [shape: bf16[128,384], index: 4, kind: input, shape index: {}]
  %s5 = inlined_call_operand.hbm [shape: f32[1,128], index: 5, kind: input, shape index: {}]
  %s6 = inlined_call_operand.vmem [shape: f32[1,128], index: 6, kind: input, shape index: {}]
  %s7 = inlined_call_operand.hbm [shape: bf16[128,512], index: 7, kind: input, shape index: {}]
  %s8 = inlined_call_operand.vmem [shape: f32[1,512], index: 8, kind: input, shape index: {}]
  %s9 = inlined_call_operand.vmem [shape: f32[1,512], index: 9, kind: input, shape index: {}]
  %s10 = inlined_call_operand.hbm [shape: bf16[256,512], index: 10, kind: input, shape index: {}]
  %s11 = inlined_call_operand.vmem [shape: f32[1,512], index: 11, kind: input, shape index: {}]
  %s12 = inlined_call_operand.vmem [shape: f32[1,512], index: 12, kind: input, shape index: {}]
  %s13 = inlined_call_operand.hbm [shape: f32[2,16,512], index: 13, kind: output, shape index: {}]
  %s14 = sld [smem:[#allocation0]]
  $region109: #{tpu_custom_call.1} parent=0
    _
  %s16 = ssub.s32 1, %s14
  %s17 = scalar_select 0, %s16, %s14
  $region1: #{tpu_custom_call.1} parent=0
    #allocation2 [shape = 'u8[32768]{0}', space=vmem, size = 0x8000, scoped, tag = 'input window, operand 0']
    #allocation3 [shape = 's32[2]{0}', space=sflag, size = 0x8, scoped, tag = 'scoped memory for tpu_custom_call.1']
    #allocation4 [shape = 's32[2]{0}', space=sflag, size = 0x8, scoped, tag = 'scoped memory for tpu_custom_call.1']
    #allocation5 [shape = 'u8[65536]{0}', space=vmem, size = 0x10000, scoped, tag = 'input window, operand 1, single buffered']
    #allocation6 [shape = 's32[1]{0}', space=sflag, size = 0x4, scoped, tag = 'scoped memory for tpu_custom_call.1']
    #allocation7 [shape = 'u8[98304]{0}', space=vmem, size = 0x18000, scoped, tag = 'input window, operand 4, single buffered']
    #allocation8 [shape = 'u8[512]{0}', space=vmem, size = 0x400, scoped, tag = 'input window, operand 5, single buffered']
    #allocation9 [shape = 's32[1]{0}', space=sflag, size = 0x4, scoped, tag = 'scoped memory for tpu_custom_call.1']
    #allocation10 [shape = 'u8[131072]{0}', space=vmem, size = 0x20000, scoped, tag = 'input window, operand 7, single buffered']
    #allocation11 [shape = 'u8[262144]{0}', space=vmem, size = 0x40000, scoped, tag = 'input window, operand 10, single buffered']
    #allocation12 [shape = 's32[1]{0}', space=sflag, size = 0x4, scoped, tag = 'scoped memory for tpu_custom_call.1']
    #allocation13 [shape = 'u8[65536]{0}', space=vmem, size = 0x10000, scoped, tag = 'output window, operand 0']
    %18 = vsyncpa [#allocation3], 0
    %s19 = scalar_lea.sflag [#allocation3], 1
    %20 = vsyncpa %s19, 0
    %21 = vsyncpa [#allocation6], 0
    %22 = vsyncpa [#allocation9], 0
    %23 = vsyncpa [#allocation12], 0
    %24 = vsyncpa [#allocation4], 0
    %s25 = scalar_lea.sflag [#allocation4], 1
    %26 = vsyncpa %s25, 0
    loop: start=0, step=1, limit=4
    $region2: #{tpu_custom_call.1} parent=1 // loop_pre_header
      _
    $region3: #{tpu_custom_call.1} parent=1 // loop_header
      %s28 = sphi 0, %s32
      %p29 = scmp.ge.s32.totalorder %s28, 4
      %s38 = sphi 0, %s40
      %s41 = sphi 0, %s38
      %s42 = sphi 0, %s41
      %s58 = sphi 0, %s42
      %s62 = sphi 0, %s62
      %s64 = sphi 0, %s62
      %s65 = sphi 0, %s64
      %s79 = sphi 0, %s65
      %s83 = sphi 0, %s83
      %s85 = sphi 0, %s83
      %s86 = sphi 0, %s85
      %s100 = sphi 0, %s86
      %s104 = sphi 0, %s104
      %s106 = sphi 0, %s104
      %s107 = sphi 0, %s106
      %s121 = sphi 0, %s107
      %s125 = sphi 0, %s125
      %s127 = sphi 0, %s125
      %s128 = sphi 0, %s127
      %s142 = sphi 0, %s128
      %s146 = sphi 0, %s146
      %s148 = sphi 0, %s146
      %s149 = sphi 0, %s148
      %s163 = sphi 0, %s149
      %s167 = sphi 0, %s167
      %s169 = sphi 0, %s167
      %s170 = sphi 0, %s169
      %s184 = sphi 0, %s170
      %s188 = sphi 0, %s188
      %s190 = sphi 0, %s188
      %s191 = sphi 0, %s190
      %s205 = sphi 0, %s191
      %s209 = sphi 0, %s209
      %s211 = sphi 0, %s209
      %s212 = sphi 0, %s211
      %s226 = sphi 0, %s212
      %s230 = sphi 0, %s230
      %s232 = sphi 0, %s230
      %s233 = sphi 0, %s232
      %s247 = sphi 0, %s233
      %s251 = sphi 0, %s251
      %s253 = sphi 0, %s251
      %s254 = sphi 0, %s253
      %s268 = sphi 0, %s254
      %s272 = sphi 0, %s272
      %s274 = sphi 0, %s272
      %s275 = sphi 0, %s274
      %s289 = sphi 0, %s275
      %s293 = sphi 0, %s293
      %s295 = sphi 0, %s293
      %s296 = sphi 0, %s295
      %s310 = sphi 0, %s296
      %s316 = sphi 0, %s318
      %s319 = sphi 0, %s316
      %s320 = sphi 0, %s319
      %s336 = sphi 0, %s320
    $region4: #{tpu_custom_call.1} parent=1 // loop_header_branch
      %31 = sbr.rel (%p29) target = $region8
    $region5: #{tpu_custom_call.1} parent=1 // loop_body
      %s33 = ssub.s32 %s28, 1
      %s34 = ssub.s32 %s28, 2
      %s35 = sadd.s32 %s28, 1
      %s36 = ssub.s32 %s28, %s35
      %p37 = scmp.eq.s32.totalorder %s36, 0
      %s39 = sadd.s32 %s38, 1
      %s40 = scalar_select %p37, %s38, %s39
      %p43 = pneg %p37
      %p44 = scmp.eq.s32.totalorder %s28, 1
      %p45 = por %p43, %p44
      %p46 = scmp.ne.s32.totalorder %s38, %s41
      %p47 = scmp.eq.s32.totalorder %s28, 0
      %p48 = por %p46, %p47
      %p49 = scmp.ne.s32.totalorder %s38, %s41
      %p50 = scmp.eq.s32.totalorder %s33, 1
      %p51 = por %p49, %p50
      %p52 = scmp.ne.s32.totalorder %s41, %s42
      %p53 = scmp.eq.s32.totalorder %s33, 0
      %p54 = por %p52, %p53
      %p55 = scmp.ne.s32.totalorder %s41, %s42
      %p56 = scmp.eq.s32.totalorder %s34, 1
      %p57 = por %p55, %p56
      %p59 = scmp.ne.s32.totalorder %s42, %s58
      %p60 = scmp.eq.s32.totalorder %s34, 0
      %p61 = por %p59, %p60
      %s63 = sadd.s32 %s62, 1
      %p66 = scmp.eq.s32.totalorder %s28, 1
      %p67 = scmp.ne.s32.totalorder %s62, %s64
      %p68 = scmp.eq.s32.totalorder %s28, 0
      %p69 = por %p67, %p68
      %p70 = scmp.ne.s32.totalorder %s62, %s64
      %p71 = scmp.eq.s32.totalorder %s33, 1
      %p72 = por %p70, %p71
      %p73 = scmp.ne.s32.totalorder %s64, %s65
      %p74 = scmp.eq.s32.totalorder %s33, 0
      %p75 = por %p73, %p74
      %p76 = scmp.ne.s32.totalorder %s64, %s65
      %p77 = scmp.eq.s32.totalorder %s34, 1
      %p78 = por %p76, %p77
      %p80 = scmp.ne.s32.totalorder %s65, %s79
      %p81 = scmp.eq.s32.totalorder %s34, 0
      %p82 = por %p80, %p81
      %s84 = sadd.s32 %s83, 1
      %p87 = scmp.eq.s32.totalorder %s28, 1
      %p88 = scmp.ne.s32.totalorder %s83, %s85
      %p89 = scmp.eq.s32.totalorder %s28, 0
      %p90 = por %p88, %p89
      %p91 = scmp.ne.s32.totalorder %s83, %s85
      %p92 = scmp.eq.s32.totalorder %s33, 1
      %p93 = por %p91, %p92
      %p94 = scmp.ne.s32.totalorder %s85, %s86
      %p95 = scmp.eq.s32.totalorder %s33, 0
      %p96 = por %p94, %p95
      %p97 = scmp.ne.s32.totalorder %s85, %s86
      %p98 = scmp.eq.s32.totalorder %s34, 1
      %p99 = por %p97, %p98
      %p101 = scmp.ne.s32.totalorder %s86, %s100
      %p102 = scmp.eq.s32.totalorder %s34, 0
      %p103 = por %p101, %p102
      %s105 = sadd.s32 %s104, 1
      %p108 = scmp.eq.s32.totalorder %s28, 1
      %p109 = scmp.ne.s32.totalorder %s104, %s106
      %p110 = scmp.eq.s32.totalorder %s28, 0
      %p111 = por %p109, %p110
      %p112 = scmp.ne.s32.totalorder %s104, %s106
      %p113 = scmp.eq.s32.totalorder %s33, 1
      %p114 = por %p112, %p113
      %p115 = scmp.ne.s32.totalorder %s106, %s107
      %p116 = scmp.eq.s32.totalorder %s33, 0
      %p117 = por %p115, %p116
      %p118 = scmp.ne.s32.totalorder %s106, %s107
      %p119 = scmp.eq.s32.totalorder %s34, 1
      %p120 = por %p118, %p119
      %p122 = scmp.ne.s32.totalorder %s107, %s121
      %p123 = scmp.eq.s32.totalorder %s34, 0
      %p124 = por %p122, %p123
      %s126 = sadd.s32 %s125, 1
      %p129 = scmp.eq.s32.totalorder %s28, 1
      %p130 = scmp.ne.s32.totalorder %s125, %s127
      %p131 = scmp.eq.s32.totalorder %s28, 0
      %p132 = por %p130, %p131
      %p133 = scmp.ne.s32.totalorder %s125, %s127
      %p134 = scmp.eq.s32.totalorder %s33, 1
      %p135 = por %p133, %p134
      %p136 = scmp.ne.s32.totalorder %s127, %s128
      %p137 = scmp.eq.s32.totalorder %s33, 0
      %p138 = por %p136, %p137
      %p139 = scmp.ne.s32.totalorder %s127, %s128
      %p140 = scmp.eq.s32.totalorder %s34, 1
      %p141 = por %p139, %p140
      %p143 = scmp.ne.s32.totalorder %s128, %s142
      %p144 = scmp.eq.s32.totalorder %s34, 0
      %p145 = por %p143, %p144
      %s147 = sadd.s32 %s146, 1
      %p150 = scmp.eq.s32.totalorder %s28, 1
      %p151 = scmp.ne.s32.totalorder %s146, %s148
      %p152 = scmp.eq.s32.totalorder %s28, 0
      %p153 = por %p151, %p152
      %p154 = scmp.ne.s32.totalorder %s146, %s148
      %p155 = scmp.eq.s32.totalorder %s33, 1
      %p156 = por %p154, %p155
      %p157 = scmp.ne.s32.totalorder %s148, %s149
      %p158 = scmp.eq.s32.totalorder %s33, 0
      %p159 = por %p157, %p158
      %p160 = scmp.ne.s32.totalorder %s148, %s149
      %p161 = scmp.eq.s32.totalorder %s34, 1
      %p162 = por %p160, %p161
      %p164 = scmp.ne.s32.totalorder %s149, %s163
      %p165 = scmp.eq.s32.totalorder %s34, 0
      %p166 = por %p164, %p165
      %s168 = sadd.s32 %s167, 1
      %p171 = scmp.eq.s32.totalorder %s28, 1
      %p172 = scmp.ne.s32.totalorder %s167, %s169
      %p173 = scmp.eq.s32.totalorder %s28, 0
      %p174 = por %p172, %p173
      %p175 = scmp.ne.s32.totalorder %s167, %s169
      %p176 = scmp.eq.s32.totalorder %s33, 1
      %p177 = por %p175, %p176
      %p178 = scmp.ne.s32.totalorder %s169, %s170
      %p179 = scmp.eq.s32.totalorder %s33, 0
      %p180 = por %p178, %p179
      %p181 = scmp.ne.s32.totalorder %s169, %s170
      %p182 = scmp.eq.s32.totalorder %s34, 1
      %p183 = por %p181, %p182
      %p185 = scmp.ne.s32.totalorder %s170, %s184
      %p186 = scmp.eq.s32.totalorder %s34, 0
      %p187 = por %p185, %p186
      %s189 = sadd.s32 %s188, 1
      %p192 = scmp.eq.s32.totalorder %s28, 1
      %p193 = scmp.ne.s32.totalorder %s188, %s190
      %p194 = scmp.eq.s32.totalorder %s28, 0
      %p195 = por %p193, %p194
      %p196 = scmp.ne.s32.totalorder %s188, %s190
      %p197 = scmp.eq.s32.totalorder %s33, 1
      %p198 = por %p196, %p197
      %p199 = scmp.ne.s32.totalorder %s190, %s191
      %p200 = scmp.eq.s32.totalorder %s33, 0
      %p201 = por %p199, %p200
      %p202 = scmp.ne.s32.totalorder %s190, %s191
      %p203 = scmp.eq.s32.totalorder %s34, 1
      %p204 = por %p202, %p203
      %p206 = scmp.ne.s32.totalorder %s191, %s205
      %p207 = scmp.eq.s32.totalorder %s34, 0
      %p208 = por %p206, %p207
      %s210 = sadd.s32 %s209, 1
      %p213 = scmp.eq.s32.totalorder %s28, 1
      %p214 = scmp.ne.s32.totalorder %s209, %s211
      %p215 = scmp.eq.s32.totalorder %s28, 0
      %p216 = por %p214, %p215
      %p217 = scmp.ne.s32.totalorder %s209, %s211
      %p218 = scmp.eq.s32.totalorder %s33, 1
      %p219 = por %p217, %p218
      %p220 = scmp.ne.s32.totalorder %s211, %s212
      %p221 = scmp.eq.s32.totalorder %s33, 0
      %p222 = por %p220, %p221
      %p223 = scmp.ne.s32.totalorder %s211, %s212
      %p224 = scmp.eq.s32.totalorder %s34, 1
      %p225 = por %p223, %p224
      %p227 = scmp.ne.s32.totalorder %s212, %s226
      %p228 = scmp.eq.s32.totalorder %s34, 0
      %p229 = por %p227, %p228
      %s231 = sadd.s32 %s230, 1
      %p234 = scmp.eq.s32.totalorder %s28, 1
      %p235 = scmp.ne.s32.totalorder %s230, %s232
      %p236 = scmp.eq.s32.totalorder %s28, 0
      %p237 = por %p235, %p236
      %p238 = scmp.ne.s32.totalorder %s230, %s232
      %p239 = scmp.eq.s32.totalorder %s33, 1
      %p240 = por %p238, %p239
      %p241 = scmp.ne.s32.totalorder %s232, %s233
      %p242 = scmp.eq.s32.totalorder %s33, 0
      %p243 = por %p241, %p242
      %p244 = scmp.ne.s32.totalorder %s232, %s233
      %p245 = scmp.eq.s32.totalorder %s34, 1
      %p246 = por %p244, %p245
      %p248 = scmp.ne.s32.totalorder %s233, %s247
      %p249 = scmp.eq.s32.totalorder %s34, 0
      %p250 = por %p248, %p249
      %s252 = sadd.s32 %s251, 1
      %p255 = scmp.eq.s32.totalorder %s28, 1
      %p256 = scmp.ne.s32.totalorder %s251, %s253
      %p257 = scmp.eq.s32.totalorder %s28, 0
      %p258 = por %p256, %p257
      %p259 = scmp.ne.s32.totalorder %s251, %s253
      %p260 = scmp.eq.s32.totalorder %s33, 1
      %p261 = por %p259, %p260
      %p262 = scmp.ne.s32.totalorder %s253, %s254
      %p263 = scmp.eq.s32.totalorder %s33, 0
      %p264 = por %p262, %p263
      %p265 = scmp.ne.s32.totalorder %s253, %s254
      %p266 = scmp.eq.s32.totalorder %s34, 1
      %p267 = por %p265, %p266
      %p269 = scmp.ne.s32.totalorder %s254, %s268
      %p270 = scmp.eq.s32.totalorder %s34, 0
      %p271 = por %p269, %p270
      %s273 = sadd.s32 %s272, 1
      %p276 = scmp.eq.s32.totalorder %s28, 1
      %p277 = scmp.ne.s32.totalorder %s272, %s274
      %p278 = scmp.eq.s32.totalorder %s28, 0
      %p279 = por %p277, %p278
      %p280 = scmp.ne.s32.totalorder %s272, %s274
      %p281 = scmp.eq.s32.totalorder %s33, 1
      %p282 = por %p280, %p281
      %p283 = scmp.ne.s32.totalorder %s274, %s275
      %p284 = scmp.eq.s32.totalorder %s33, 0
      %p285 = por %p283, %p284
      %p286 = scmp.ne.s32.totalorder %s274, %s275
      %p287 = scmp.eq.s32.totalorder %s34, 1
      %p288 = por %p286, %p287
      %p290 = scmp.ne.s32.totalorder %s275, %s289
      %p291 = scmp.eq.s32.totalorder %s34, 0
      %p292 = por %p290, %p291
      %s294 = sadd.s32 %s293, 1
      %p297 = scmp.eq.s32.totalorder %s28, 1
      %p298 = scmp.ne.s32.totalorder %s293, %s295
      %p299 = scmp.eq.s32.totalorder %s28, 0
      %p300 = por %p298, %p299
      %p301 = scmp.ne.s32.totalorder %s293, %s295
      %p302 = scmp.eq.s32.totalorder %s33, 1
      %p303 = por %p301, %p302
      %p304 = scmp.ne.s32.totalorder %s295, %s296
      %p305 = scmp.eq.s32.totalorder %s33, 0
      %p306 = por %p304, %p305
      %p307 = scmp.ne.s32.totalorder %s295, %s296
      %p308 = scmp.eq.s32.totalorder %s34, 1
      %p309 = por %p307, %p308
      %p311 = scmp.ne.s32.totalorder %s296, %s310
      %p312 = scmp.eq.s32.totalorder %s34, 0
      %p313 = por %p311, %p312
      %s314 = ssub.s32 %s28, %s35
      %p315 = scmp.eq.s32.totalorder %s314, 0
      %s317 = sadd.s32 %s316, 1
      %s318 = scalar_select %p315, %s316, %s317
      %p321 = pneg %p315
      %p322 = scmp.eq.s32.totalorder %s28, 1
      %p323 = por %p321, %p322
      %p324 = scmp.ne.s32.totalorder %s316, %s319
      %p325 = scmp.eq.s32.totalorder %s28, 0
      %p326 = por %p324, %p325
      %p327 = scmp.ne.s32.totalorder %s316, %s319
      %p328 = scmp.eq.s32.totalorder %s33, 1
      %p329 = por %p327, %p328
      %p330 = scmp.ne.s32.totalorder %s319, %s320
      %p331 = scmp.eq.s32.totalorder %s33, 0
      %p332 = por %p330, %p331
      %p333 = scmp.ne.s32.totalorder %s319, %s320
      %p334 = scmp.eq.s32.totalorder %s34, 1
      %p335 = por %p333, %p334
      %p337 = scmp.ne.s32.totalorder %s320, %s336
      %p338 = scmp.eq.s32.totalorder %s34, 0
      %p339 = por %p337, %p338
      %p340 = scmp.le.s32.totalorder 1, %s28
      %p341 = scmp.lt.s32.totalorder %s28, 3
      %p342 = pnand %p340, %p341
      %p343 = pneg %p342
      // Predicated region
      $region9: #{tpu_custom_call.1} parent=5 // pred_check
        _
      $region10: #{tpu_custom_call.1} parent=5 // pred_check_branch
        %345 = sbr.rel (%p342) target = $region12
      $region11: #{tpu_custom_call.1} parent=5 // pred_region
        %s346 = ssub.s32 %s28, 1
        // Predicated region
        $region13: #{tpu_custom_call.1} parent=11 // pred_check
          %p347 = pneg %p75
        $region14: #{tpu_custom_call.1} parent=11 // pred_check_branch
          %349 = sbr.rel (%p347) target = $region16
        $region15: #{tpu_custom_call.1} parent=11 // pred_region
          %s351 = ssub.s32 2048, 2048
          %352 = vsyncadd [#allocation6], %s351
          %s353 = sshll.u32 [#allocation5], 4
          %s354 = int_to_ptr.vmem [resolvable:$true] %s353
          %359 = dma.hbm_to_vmem [thread:$0]  %s1, 2048, %s354, [#allocation6], 64, 64, 4
        $region16: #{tpu_custom_call.1} parent=11 // pred_fallthru
          _
        // Predicated region
        $region17: #{tpu_custom_call.1} parent=11 // pred_check
          %p360 = pneg %p96
        $region18: #{tpu_custom_call.1} parent=11 // pred_check_branch
          %362 = sbr.rel (%p360) target = $region20
        $region19: #{tpu_custom_call.1} parent=11 // pred_region
          _
        $region20: #{tpu_custom_call.1} parent=11 // pred_fallthru
          _
        // Predicated region
        $region21: #{tpu_custom_call.1} parent=11 // pred_check
          %p363 = pneg %p117
        $region22: #{tpu_custom_call.1} parent=11 // pred_check_branch
          %365 = sbr.rel (%p363) target = $region24
        $region23: #{tpu_custom_call.1} parent=11 // pred_region
          _
        $region24: #{tpu_custom_call.1} parent=11 // pred_fallthru
          _
        // Predicated region
        $region25: #{tpu_custom_call.1} parent=11 // pred_check
          %p366 = pneg %p138
        $region26: #{tpu_custom_call.1} parent=11 // pred_check_branch
          %368 = sbr.rel (%p366) target = $region28
        $region27: #{tpu_custom_call.1} parent=11 // pred_region
          %s370 = ssub.s32 3072, 3072
          %371 = vsyncadd [#allocation6], %s370
          %s372 = sshll.u32 [#allocation7], 4
          %s373 = int_to_ptr.vmem [resolvable:$true] %s372
          %378 = dma.hbm_to_vmem [thread:$0]  %s4, 3072, %s373, [#allocation6], 192, 192, 12
        $region28: #{tpu_custom_call.1} parent=11 // pred_fallthru
          _
        // Predicated region
        $region29: #{tpu_custom_call.1} parent=11 // pred_check
          %p379 = pneg %p159
        $region30: #{tpu_custom_call.1} parent=11 // pred_check_branch
          %381 = sbr.rel (%p379) target = $region32
        $region31: #{tpu_custom_call.1} parent=11 // pred_region
          %s383 = ssub.s32 16, 16
          %384 = vsyncadd [#allocation9], %s383
          %s386 = sshll.u32 [#allocation8], 4
          %s387 = int_to_ptr.vmem [resolvable:$true] %s386
          %389 = dma.hbm_to_vmem [thread:$0]  %s5, 16, %s387, [#allocation9]
        $region32: #{tpu_custom_call.1} parent=11 // pred_fallthru
          _
        // Predicated region
        $region33: #{tpu_custom_call.1} parent=11 // pred_check
          %p390 = pneg %p180
        $region34: #{tpu_custom_call.1} parent=11 // pred_check_branch
          %392 = sbr.rel (%p390) target = $region36
        $region35: #{tpu_custom_call.1} parent=11 // pred_region
          _
        $region36: #{tpu_custom_call.1} parent=11 // pred_fallthru
          _
        // Predicated region
        $region37: #{tpu_custom_call.1} parent=11 // pred_check
          %p393 = pneg %p201
        $region38: #{tpu_custom_call.1} parent=11 // pred_check_branch
          %395 = sbr.rel (%p393) target = $region40
        $region39: #{tpu_custom_call.1} parent=11 // pred_region
          %s397 = ssub.s32 4096, 4096
          %398 = vsyncadd [#allocation9], %s397
          %s399 = sshll.u32 [#allocation10], 4
          %s400 = int_to_ptr.vmem [resolvable:$true] %s399
          %405 = dma.hbm_to_vmem [thread:$0]  %s7, 4096, %s400, [#allocation9], 256, 256, 16
        $region40: #{tpu_custom_call.1} parent=11 // pred_fallthru
          _
        // Predicated region
        $region41: #{tpu_custom_call.1} parent=11 // pred_check
          %p406 = pneg %p222
        $region42: #{tpu_custom_call.1} parent=11 // pred_check_branch
          %408 = sbr.rel (%p406) target = $region44
        $region43: #{tpu_custom_call.1} parent=11 // pred_region
          _
        $region44: #{tpu_custom_call.1} parent=11 // pred_fallthru
          _
        // Predicated region
        $region45: #{tpu_custom_call.1} parent=11 // pred_check
          %p409 = pneg %p243
        $region46: #{tpu_custom_call.1} parent=11 // pred_check_branch
          %411 = sbr.rel (%p409) target = $region48
        $region47: #{tpu_custom_call.1} parent=11 // pred_region
          _
        $region48: #{tpu_custom_call.1} parent=11 // pred_fallthru
          _
        // Predicated region
        $region49: #{tpu_custom_call.1} parent=11 // pred_check
          %p412 = pneg %p264
        $region50: #{tpu_custom_call.1} parent=11 // pred_check_branch
          %414 = sbr.rel (%p412) target = $region52
        $region51: #{tpu_custom_call.1} parent=11 // pred_region
          %s416 = ssub.s32 8192, 8192
          %417 = vsyncadd [#allocation12], %s416
          %s418 = sshll.u32 [#allocation11], 4
          %s419 = int_to_ptr.vmem [resolvable:$true] %s418
          %424 = dma.hbm_to_vmem [thread:$0]  %s10, 8192, %s419, [#allocation12], 256, 256, 16
        $region52: #{tpu_custom_call.1} parent=11 // pred_fallthru
          _
        // Predicated region
        $region53: #{tpu_custom_call.1} parent=11 // pred_check
          %p425 = pneg %p285
        $region54: #{tpu_custom_call.1} parent=11 // pred_check_branch
          %427 = sbr.rel (%p425) target = $region56
        $region55: #{tpu_custom_call.1} parent=11 // pred_region
          _
        $region56: #{tpu_custom_call.1} parent=11 // pred_fallthru
          _
        // Predicated region
        $region57: #{tpu_custom_call.1} parent=11 // pred_check
          %p428 = pneg %p306
        $region58: #{tpu_custom_call.1} parent=11 // pred_check_branch
          %430 = sbr.rel (%p428) target = $region60
        $region59: #{tpu_custom_call.1} parent=11 // pred_region
          _
        $region60: #{tpu_custom_call.1} parent=11 // pred_fallthru
          _
      $region12: #{tpu_custom_call.1} parent=5 // pred_fallthru
        _
      %p431 = scmp.lt.s32.totalorder %s28, 2
      // Predicated region
      $region61: #{tpu_custom_call.1} parent=5 // pred_check
        %p432 = pneg %p431
      $region62: #{tpu_custom_call.1} parent=5 // pred_check_branch
        %434 = sbr.rel (%p432) target = $region64
      $region63: #{tpu_custom_call.1} parent=5 // pred_region
        // Predicated region
        $region65: #{tpu_custom_call.1} parent=63 // pred_check
          %p435 = pneg %p48
        $region66: #{tpu_custom_call.1} parent=63 // pred_check_branch
          %437 = sbr.rel (%p435) target = $region68
        $region67: #{tpu_custom_call.1} parent=63 // pred_region
          %s438 = sand.u32 %s38, 1
          %s439 = scalar_lea.sflag [#allocation3], %s438
          %s440 = sand.u32 %s38, 1
          %s441 = smul.addr %s440, 32
          %s442 = scalar_lea.vmem [#allocation2], %s441
          %s444 = ssub.s32 512, 512
          %445 = vsyncadd %s439, %s444
          %s446 = smul.addr %s28, 4
          %s447 = smul.addr %s446, 128
          %s448 = scalar_lea.hbm %s0, %s447
          %s449 = sshll.u32 %s442, 4
          %s450 = int_to_ptr.vmem [resolvable:$true] %s449
          %455 = dma.hbm_to_vmem [thread:$0]  %s448, 512, %s450, %s439, 256, 256, 16
        $region68: #{tpu_custom_call.1} parent=63 // pred_fallthru
          _
      $region64: #{tpu_custom_call.1} parent=5 // pred_fallthru
        _
      %p456 = scmp.le.s32.totalorder 1, %s28
      %p457 = scmp.lt.s32.totalorder %s28, 3
      %p458 = pnand %p456, %p457
      %p459 = pneg %p458
      // Predicated region
      $region69: #{tpu_custom_call.1} parent=5 // pred_check
        _
      $region70: #{tpu_custom_call.1} parent=5 // pred_check_branch
        %461 = sbr.rel (%p458) target = $region72
      $region71: #{tpu_custom_call.1} parent=5 // pred_region
        %s462 = ssub.s32 %s28, 1
        %s463 = sand.u32 %s41, 1
        %s464 = scalar_lea.sflag [#allocation3], %s463
        %s465 = sand.u32 %s41, 1
        %s466 = smul.addr %s465, 32
        %s467 = scalar_lea.vmem [#allocation2], %s466
        // Predicated region
        $region73: #{tpu_custom_call.1} parent=71 // pred_check
          %p468 = pneg %p54
        $region74: #{tpu_custom_call.1} parent=71 // pred_check_branch
          %470 = sbr.rel (%p468) target = $region76
        $region75: #{tpu_custom_call.1} parent=71 // pred_region
          %471 = dma.done %s464, 512
        $region76: #{tpu_custom_call.1} parent=71 // pred_fallthru
          _
        // Predicated region
        $region77: #{tpu_custom_call.1} parent=71 // pred_check
          %p472 = pneg %p75
        $region78: #{tpu_custom_call.1} parent=71 // pred_check_branch
          %474 = sbr.rel (%p472) target = $region80
        $region79: #{tpu_custom_call.1} parent=71 // pred_region
          %475 = dma.done [#allocation6], 2048
        $region80: #{tpu_custom_call.1} parent=71 // pred_fallthru
          _
        // Predicated region
        $region81: #{tpu_custom_call.1} parent=71 // pred_check
          %p476 = pneg %p138
        $region82: #{tpu_custom_call.1} parent=71 // pred_check_branch
          %478 = sbr.rel (%p476) target = $region84
        $region83: #{tpu_custom_call.1} parent=71 // pred_region
          %479 = dma.done [#allocation6], 3072
        $region84: #{tpu_custom_call.1} parent=71 // pred_fallthru
          _
        // Predicated region
        $region85: #{tpu_custom_call.1} parent=71 // pred_check
          %p480 = pneg %p159
        $region86: #{tpu_custom_call.1} parent=71 // pred_check_branch
          %482 = sbr.rel (%p480) target = $region88
        $region87: #{tpu_custom_call.1} parent=71 // pred_region
          %483 = dma.done [#allocation9], 16
        $region88: #{tpu_custom_call.1} parent=71 // pred_fallthru
          _
        // Predicated region
        $region89: #{tpu_custom_call.1} parent=71 // pred_check
          %p484 = pneg %p201
        $region90: #{tpu_custom_call.1} parent=71 // pred_check_branch
          %486 = sbr.rel (%p484) target = $region92
        $region91: #{tpu_custom_call.1} parent=71 // pred_region
          %487 = dma.done [#allocation9], 4096
        $region92: #{tpu_custom_call.1} parent=71 // pred_fallthru
          _
        // Predicated region
        $region93: #{tpu_custom_call.1} parent=71 // pred_check
          %p488 = pneg %p264
        $region94: #{tpu_custom_call.1} parent=71 // pred_check_branch
          %490 = sbr.rel (%p488) target = $region96
        $region95: #{tpu_custom_call.1} parent=71 // pred_region
          %491 = dma.done [#allocation12], 8192
        $region96: #{tpu_custom_call.1} parent=71 // pred_fallthru
          _
        %s492 = sand.u32 %s41, 1
        %s493 = scalar_lea.sflag [#allocation3], %s492
        %s494 = sand.u32 %s41, 1
        %s495 = smul.addr %s494, 32
        %s496 = scalar_lea.vmem [#allocation2], %s495
        %p497 = pneg %p54
        %p498 = pneg %p51
        %p499 = pneg %p75
        %p500 = pneg %p72
        %p501 = pneg %p96
        %p502 = pneg %p93
        %p503 = pneg %p117
        %p504 = pneg %p114
        %p505 = pneg %p138
        %p506 = pneg %p135
        %p507 = pneg %p159
        %p508 = pneg %p156
        %p509 = pneg %p180
        %p510 = pneg %p177
        %p511 = pneg %p201
        %p512 = pneg %p198
        %p513 = pneg %p222
        %p514 = pneg %p219
        %p515 = pneg %p243
        %p516 = pneg %p240
        %p517 = pneg %p264
        %p518 = pneg %p261
        %p519 = pneg %p285
        %p520 = pneg %p282
        %p521 = pneg %p306
        %p522 = pneg %p303
        %p523 = pneg %p332
        %p524 = pneg %p329
        %s525 = sand.u32 %s319, 1
        %s526 = scalar_lea.sflag [#allocation4], %s525
        %s527 = sand.u32 %s319, 1
        %s528 = smul.addr %s527, 64
        %s529 = scalar_lea.vmem [#allocation13], %s528
        %v531 = vld [vmem:[%s467] sm:$0xff]
        %v532 = vld [vmem:[%s467 + $0x8] sm:$0xff]
        %v533 = vld [vmem:[%s467 + $0x10] sm:$0xff]
        %v534 = vld [vmem:[%s467 + $0x18] sm:$0xff]
        %v535 = vpack.c.bf16 %v533, %v531
        %v536 = vpack.c.bf16 %v534, %v532
        %v537 = vld [vmem:[#allocation5] sm:$0xf]
        %v538 = vld [vmem:[#allocation5 + $0x4] sm:$0xf]
        %v539 = vld [vmem:[#allocation5 + $0x8] sm:$0xf]
        %v540 = vld [vmem:[#allocation5 + $0xc] sm:$0xf]
        %v541 = vld [vmem:[#allocation5 + $0x10] sm:$0xf]
        %v542 = vld [vmem:[#allocation5 + $0x14] sm:$0xf]
        %v543 = vld [vmem:[#allocation5 + $0x18] sm:$0xf]
        %v544 = vld [vmem:[#allocation5 + $0x1c] sm:$0xf]
        %v545 = vld [vmem:[#allocation5 + $0x20] sm:$0xf]
        %v546 = vld [vmem:[#allocation5 + $0x24] sm:$0xf]
        %v547 = vld [vmem:[#allocation5 + $0x28] sm:$0xf]
        %v548 = vld [vmem:[#allocation5 + $0x2c] sm:$0xf]
        %v549 = vld [vmem:[#allocation5 + $0x30] sm:$0xf]
        %v550 = vld [vmem:[#allocation5 + $0x34] sm:$0xf]
        %v551 = vld [vmem:[#allocation5 + $0x38] sm:$0xf]
        %v552 = vld [vmem:[#allocation5 + $0x3c] sm:$0xf]
        %v553 = vld [vmem:[#allocation5 + $0x40] sm:$0xf]
        %v554 = vld [vmem:[#allocation5 + $0x44] sm:$0xf]
        %v555 = vld [vmem:[#allocation5 + $0x48] sm:$0xf]
        %v556 = vld [vmem:[#allocation5 + $0x4c] sm:$0xf]
        %v557 = vld [vmem:[#allocation5 + $0x50] sm:$0xf]
        %v558 = vld [vmem:[#allocation5 + $0x54] sm:$0xf]
        %v559 = vld [vmem:[#allocation5 + $0x58] sm:$0xf]
        %v560 = vld [vmem:[#allocation5 + $0x5c] sm:$0xf]
        %v561 = vld [vmem:[#allocation5 + $0x60] sm:$0xf]
        %v562 = vld [vmem:[#allocation5 + $0x64] sm:$0xf]
        %v563 = vld [vmem:[#allocation5 + $0x68] sm:$0xf]
        %v564 = vld [vmem:[#allocation5 + $0x6c] sm:$0xf]
        %v565 = vld [vmem:[#allocation5 + $0x70] sm:$0xf]
        %v566 = vld [vmem:[#allocation5 + $0x74] sm:$0xf]
        %v567 = vld [vmem:[#allocation5 + $0x78] sm:$0xf]
        %v568 = vld [vmem:[#allocation5 + $0x7c] sm:$0xf]
        %v601 = vunpack.c.l.b16 %v537
        %v602 = vunpack.c.l.b16 %v538
        %v603 = vunpack.c.l.b16 %v539
        %v604 = vunpack.c.l.b16 %v540
        %v605 = vunpack.c.l.b16 %v541
        %v606 = vunpack.c.l.b16 %v542
        %v607 = vunpack.c.l.b16 %v543
        %v608 = vunpack.c.l.b16 %v544
        %v609 = vunpack.c.l.b16 %v545
        %v610 = vunpack.c.l.b16 %v546
        %v611 = vunpack.c.l.b16 %v547
        %v612 = vunpack.c.l.b16 %v548
        %v613 = vunpack.c.l.b16 %v549
        %v614 = vunpack.c.l.b16 %v550
        %v615 = vunpack.c.l.b16 %v551
        %v616 = vunpack.c.l.b16 %v552
        %v617 = vunpack.c.l.b16 %v553
        %v618 = vunpack.c.l.b16 %v554
        %v619 = vunpack.c.l.b16 %v555
        %v620 = vunpack.c.l.b16 %v556
        %v621 = vunpack.c.l.b16 %v557
        %v622 = vunpack.c.l.b16 %v558
        %v623 = vunpack.c.l.b16 %v559
        %v624 = vunpack.c.l.b16 %v560
        %v625 = vunpack.c.l.b16 %v561
        %v626 = vunpack.c.l.b16 %v562
        %v627 = vunpack.c.l.b16 %v563
        %v628 = vunpack.c.l.b16 %v564
        %v629 = vunpack.c.l.b16 %v565
        %v630 = vunpack.c.l.b16 %v566
        %v631 = vunpack.c.l.b16 %v567
        %v632 = vunpack.c.l.b16 %v568
        %v633 = vpack.c.b16 %v602, %v601
        %v634 = vpack.c.b16 %v604, %v603
        %v635 = vpack.c.b16 %v606, %v605
        %v636 = vpack.c.b16 %v608, %v607
        %v637 = vpack.c.b16 %v610, %v609
        %v638 = vpack.c.b16 %v612, %v611
        %v639 = vpack.c.b16 %v614, %v613
        %v640 = vpack.c.b16 %v616, %v615
        %v641 = vpack.c.b16 %v618, %v617
        %v642 = vpack.c.b16 %v620, %v619
        %v643 = vpack.c.b16 %v622, %v621
        %v644 = vpack.c.b16 %v624, %v623
        %v645 = vpack.c.b16 %v626, %v625
        %v646 = vpack.c.b16 %v628, %v627
        %v647 = vpack.c.b16 %v630, %v629
        %v648 = vpack.c.b16 %v632, %v631
        %665 = vmatprep.subr.bf16.mxu0 0
        %666 = vmatpush1.bf16.msra.mxu0 %v633
        %667 = vmatprep.subr.bf16.mxu0 0
        %668 = vmatpush1.bf16.msra.mxu0 %v634
        %669 = vmatprep.subr.bf16.mxu0 0
        %670 = vmatpush1.bf16.msra.mxu0 %v635
        %671 = vmatprep.subr.bf16.mxu0 0
        %672 = vmatpush1.bf16.msra.mxu0 %v636
        %673 = vmatprep.subr.bf16.mxu0 0
        %674 = vmatpush1.bf16.msra.mxu0 %v637
        %675 = vmatprep.subr.bf16.mxu0 0
        %676 = vmatpush1.bf16.msra.mxu0 %v638
        %677 = vmatprep.subr.bf16.mxu0 0
        %678 = vmatpush1.bf16.msra.mxu0 %v639
        %679 = vmatprep.subr.bf16.mxu0 0
        %680 = vmatpush1.bf16.msra.mxu0 %v640
        %681 = vmatprep.subr.bf16.mxu0 0
        %682 = vmatpush1.bf16.msra.mxu0 %v641
        %683 = vmatprep.subr.bf16.mxu0 0
        %684 = vmatpush1.bf16.msra.mxu0 %v642
        %685 = vmatprep.subr.bf16.mxu0 0
        %686 = vmatpush1.bf16.msra.mxu0 %v643
        %687 = vmatprep.subr.bf16.mxu0 0
        %688 = vmatpush1.bf16.msra.mxu0 %v644
        %689 = vmatprep.subr.bf16.mxu0 0
        %690 = vmatpush1.bf16.msra.mxu0 %v645
        %691 = vmatprep.subr.bf16.mxu0 0
        %692 = vmatpush1.bf16.msra.mxu0 %v646
        %693 = vmatprep.subr.bf16.mxu0 0
        %694 = vmatpush1.bf16.msra.mxu0 %v647
        %695 = vmatprep.subr.bf16.mxu0 0
        %696 = vmatpush1.bf16.msra.mxu0 %v648
        %697 = vmatprep.mubr.bf16.mxu0 %v536
        %698 = vmatmul.mubr.bf16.gmra.mrb[0].mxu0 %v535
        %v699 = vpop.f32.mrb[0].mxu0
        %v700 = vadd.f32 0.0, %v699
        %v701 = vpop.f32.mrb[0].mxu0
        %v702 = vpop.f32.mrb[0].mxu0
        %v703 = vadd.f32 0.0, %v702
        %v704 = vpop.f32.mrb[0].mxu0
        %705 = vdwg.mxu0
        %v706 = vld [vmem:[%s2] sm:$0x1]
        %v708 = vlaneseq
        %v709 = vshrl.u32 %v708, 7
        %v710 = vsub.s32 0, %v709
        %v711 = vrot.slane %v706, %v710
        %v713 = vmul.f32 %v700, %v711
        %v714 = vmul.f32 %v703, %v711
        %v715 = vld [vmem:[%s3] sm:$0x1]
        %v717 = vlaneseq
        %v718 = vshrl.u32 %v717, 7
        %v719 = vsub.s32 0, %v718
        %v720 = vrot.slane %v715, %v719
        %v722 = vadd.f32 %v713, %v720
        %v723 = vadd.f32 %v714, %v720
        %vm724 = vcmp.gt.f32.partialorder %v722, 0.0
        %vm725 = vcmp.gt.f32.partialorder %v723, 0.0
        %v726 = vmul.f32 %v722, 0.01
        %v727 = vmul.f32 %v723, 0.01
        %v728 = vsel %vm724, %v722, %v726
        %v729 = vsel %vm725, %v723, %v727
        %v730 = vpack.c.bf16 %v729, %v728
        %v731 = vld [vmem:[#allocation7] sm:$0xff]
        %v732 = vld [vmem:[#allocation7 + $0x8] sm:$0xf]
        %v733 = vld [vmem:[#allocation7 + $0xc] sm:$0xff]
        %v734 = vld [vmem:[#allocation7 + $0x14] sm:$0xf]
        %v735 = vld [vmem:[#allocation7 + $0x18] sm:$0xff]
        %v736 = vld [vmem:[#allocation7 + $0x20] sm:$0xf]
        %v737 = vld [vmem:[#allocation7 + $0x24] sm:$0xff]
        %v738 = vld [vmem:[#allocation7 + $0x2c] sm:$0xf]
        %v739 = vld [vmem:[#allocation7 + $0x30] sm:$0xff]
        %v740 = vld [vmem:[#allocation7 + $0x38] sm:$0xf]
        %v741 = vld [vmem:[#allocation7 + $0x3c] sm:$0xff]
        %v742 = vld [vmem:[#allocation7 + $0x44] sm:$0xf]
        %v743 = vld [vmem:[#allocation7 + $0x48] sm:$0xff]
        %v744 = vld [vmem:[#allocation7 + $0x50] sm:$0xf]
        %v745 = vld [vmem:[#allocation7 + $0x54] sm:$0xff]
        %v746 = vld [vmem:[#allocation7 + $0x5c] sm:$0xf]
        %v747 = vld [vmem:[#allocation7 + $0x60] sm:$0xff]
        %v748 = vld [vmem:[#allocation7 + $0x68] sm:$0xf]
        %v749 = vld [vmem:[#allocation7 + $0x6c] sm:$0xff]
        %v750 = vld [vmem:[#allocation7 + $0x74] sm:$0xf]
        %v751 = vld [vmem:[#allocation7 + $0x78] sm:$0xff]
        %v752 = vld [vmem:[#allocation7 + $0x80] sm:$0xf]
        %v753 = vld [vmem:[#allocation7 + $0x84] sm:$0xff]
        %v754 = vld [vmem:[#allocation7 + $0x8c] sm:$0xf]
        %v755 = vld [vmem:[#allocation7 + $0x90] sm:$0xff]
        %v756 = vld [vmem:[#allocation7 + $0x98] sm:$0xf]
        %v757 = vld [vmem:[#allocation7 + $0x9c] sm:$0xff]
        %v758 = vld [vmem:[#allocation7 + $0xa4] sm:$0xf]
        %v759 = vld [vmem:[#allocation7 + $0xa8] sm:$0xff]
        %v760 = vld [vmem:[#allocation7 + $0xb0] sm:$0xf]
        %v761 = vld [vmem:[#allocation7 + $0xb4] sm:$0xff]
        %v762 = vld [vmem:[#allocation7 + $0xbc] sm:$0xf]
        %v795 = vunpack.c.l.b16 %v731
        %v796 = vunpack.c.h.b16 %v731
        %v797 = vunpack.c.l.b16 %v732
        %v798 = vunpack.c.l.b16 %v733
        %v799 = vunpack.c.h.b16 %v733
        %v800 = vunpack.c.l.b16 %v734
        %v801 = vunpack.c.l.b16 %v735
        %v802 = vunpack.c.h.b16 %v735
        %v803 = vunpack.c.l.b16 %v736
        %v804 = vunpack.c.l.b16 %v737
        %v805 = vunpack.c.h.b16 %v737
        %v806 = vunpack.c.l.b16 %v738
        %v807 = vunpack.c.l.b16 %v739
        %v808 = vunpack.c.h.b16 %v739
        %v809 = vunpack.c.l.b16 %v740
        %v810 = vunpack.c.l.b16 %v741
        %v811 = vunpack.c.h.b16 %v741
        %v812 = vunpack.c.l.b16 %v742
        %v813 = vunpack.c.l.b16 %v743
        %v814 = vunpack.c.h.b16 %v743
        %v815 = vunpack.c.l.b16 %v744
        %v816 = vunpack.c.l.b16 %v745
        %v817 = vunpack.c.h.b16 %v745
        %v818 = vunpack.c.l.b16 %v746
        %v819 = vunpack.c.l.b16 %v747
        %v820 = vunpack.c.h.b16 %v747
        %v821 = vunpack.c.l.b16 %v748
        %v822 = vunpack.c.l.b16 %v749
        %v823 = vunpack.c.h.b16 %v749
        %v824 = vunpack.c.l.b16 %v750
        %v825 = vunpack.c.l.b16 %v751
        %v826 = vunpack.c.h.b16 %v751
        %v827 = vunpack.c.l.b16 %v752
        %v828 = vunpack.c.l.b16 %v753
        %v829 = vunpack.c.h.b16 %v753
        %v830 = vunpack.c.l.b16 %v754
        %v831 = vunpack.c.l.b16 %v755
        %v832 = vunpack.c.h.b16 %v755
        %v833 = vunpack.c.l.b16 %v756
        %v834 = vunpack.c.l.b16 %v757
        %v835 = vunpack.c.h.b16 %v757
        %v836 = vunpack.c.l.b16 %v758
        %v837 = vunpack.c.l.b16 %v759
        %v838 = vunpack.c.h.b16 %v759
        %v839 = vunpack.c.l.b16 %v760
        %v840 = vunpack.c.l.b16 %v761
        %v841 = vunpack.c.h.b16 %v761
        %v842 = vunpack.c.l.b16 %v762
        %v843 = vpack.c.b16 %v798, %v795
        %v844 = vpack.c.b16 %v799, %v796
        %v845 = vpack.c.b16 %v800, %v797
        %v846 = vpack.c.b16 %v804, %v801
        %v847 = vpack.c.b16 %v805, %v802
        %v848 = vpack.c.b16 %v806, %v803
        %v849 = vpack.c.b16 %v810, %v807
        %v850 = vpack.c.b16 %v811, %v808
        %v851 = vpack.c.b16 %v812, %v809
        %v852 = vpack.c.b16 %v816, %v813
        %v853 = vpack.c.b16 %v817, %v814
        %v854 = vpack.c.b16 %v818, %v815
        %v855 = vpack.c.b16 %v822, %v819
        %v856 = vpack.c.b16 %v823, %v820
        %v857 = vpack.c.b16 %v824, %v821
        %v858 = vpack.c.b16 %v828, %v825
        %v859 = vpack.c.b16 %v829, %v826
        %v860 = vpack.c.b16 %v830, %v827
        %v861 = vpack.c.b16 %v834, %v831
        %v862 = vpack.c.b16 %v835, %v832
        %v863 = vpack.c.b16 %v836, %v833
        %v864 = vpack.c.b16 %v840, %v837
        %v865 = vpack.c.b16 %v841, %v838
        %v866 = vpack.c.b16 %v842, %v839
        %891 = vmatprep.subr.bf16.mxu0 %v844
        %892 = vmatpush1.bf16.msra.mxu0 %v843
        %893 = vmatprep.subr.bf16.mxu0 %v847
        %894 = vmatpush1.bf16.msra.mxu0 %v846
        %895 = vmatprep.subr.bf16.mxu0 %v850
        %896 = vmatpush1.bf16.msra.mxu0 %v849
        %897 = vmatprep.subr.bf16.mxu0 %v853
        %898 = vmatpush1.bf16.msra.mxu0 %v852
        %899 = vmatprep.subr.bf16.mxu0 %v856
        %900 = vmatpush1.bf16.msra.mxu0 %v855
        %901 = vmatprep.subr.bf16.mxu0 %v859
        %902 = vmatpush1.bf16.msra.mxu0 %v858
        %903 = vmatprep.subr.bf16.mxu0 %v862
        %904 = vmatpush1.bf16.msra.mxu0 %v861
        %905 = vmatprep.subr.bf16.mxu0 %v865
        %906 = vmatpush1.bf16.msra.mxu0 %v864
        %907 = vmatprep.subr.bf16.mxu0 0
        %908 = vmatpush1.bf16.msra.mxu0 0
        %909 = vmatprep.subr.bf16.mxu0 0
        %910 = vmatpush1.bf16.msra.mxu0 0
        %911 = vmatprep.subr.bf16.mxu0 0
        %912 = vmatpush1.bf16.msra.mxu0 0
        %913 = vmatprep.subr.bf16.mxu0 0
        %914 = vmatpush1.bf16.msra.mxu0 0
        %915 = vmatprep.subr.bf16.mxu0 0
        %916 = vmatpush1.bf16.msra.mxu0 0
        %917 = vmatprep.subr.bf16.mxu0 0
        %918 = vmatpush1.bf16.msra.mxu0 0
        %919 = vmatprep.subr.bf16.mxu0 0
        %920 = vmatpush1.bf16.msra.mxu0 0
        %921 = vmatprep.subr.bf16.mxu0 0
        %922 = vmatpush1.bf16.msra.mxu0 0
        %923 = vmatprep.mubr.bf16.mxu0 0
        %924 = vmatmul.mubr.bf16.gmra.mrb[0].mxu0 %v730
        %v925 = vpop.f32.mrb[0].mxu0
        %v926 = vadd.f32 0.0, %v925
        %v927 = vpop.f32.mrb[0].mxu0
        %v928 = vadd.f32 0.0, %v927
        %v929 = vpop.f32.mrb[0].mxu0
        %v930 = vadd.f32 0.0, %v929
        %v931 = vpop.f32.mrb[0].mxu0
        %v932 = vadd.f32 0.0, %v931
        %933 = vdwg.mxu0
        %934 = vmatprep.subr.bf16.mxu0 0
        %935 = vmatpush1.bf16.msra.mxu0 %v845
        %936 = vmatprep.subr.bf16.mxu0 0
        %937 = vmatpush1.bf16.msra.mxu0 %v848
        %938 = vmatprep.subr.bf16.mxu0 0
        %939 = vmatpush1.bf16.msra.mxu0 %v851
        %940 = vmatprep.subr.bf16.mxu0 0
        %941 = vmatpush1.bf16.msra.mxu0 %v854
        %942 = vmatprep.subr.bf16.mxu0 0
        %943 = vmatpush1.bf16.msra.mxu0 %v857
        %944 = vmatprep.subr.bf16.mxu0 0
        %945 = vmatpush1.bf16.msra.mxu0 %v860
        %946 = vmatprep.subr.bf16.mxu0 0
        %947 = vmatpush1.bf16.msra.mxu0 %v863
        %948 = vmatprep.subr.bf16.mxu0 0
        %949 = vmatpush1.bf16.msra.mxu0 %v866
        %950 = vmatprep.subr.bf16.mxu0 0
        %951 = vmatpush1.bf16.msra.mxu0 0
        %952 = vmatprep.subr.bf16.mxu0 0
        %953 = vmatpush1.bf16.msra.mxu0 0
        %954 = vmatprep.subr.bf16.mxu0 0
        %955 = vmatpush1.bf16.msra.mxu0 0
        %956 = vmatprep.subr.bf16.mxu0 0
        %957 = vmatpush1.bf16.msra.mxu0 0
        %958 = vmatprep.subr.bf16.mxu0 0
        %959 = vmatpush1.bf16.msra.mxu0 0
        %960 = vmatprep.subr.bf16.mxu0 0
        %961 = vmatpush1.bf16.msra.mxu0 0
        %962 = vmatprep.subr.bf16.mxu0 0
        %963 = vmatpush1.bf16.msra.mxu0 0
        %964 = vmatprep.subr.bf16.mxu0 0
        %965 = vmatpush1.bf16.msra.mxu0 0
        %966 = vmatprep.mubr.bf16.mxu0 0
        %967 = vmatmul.mubr.bf16.gmra.mrb[0].mxu0 %v730
        %v968 = vpop.f32.mrb[0].mxu0
        %v969 = vadd.f32 0.0, %v968
        %v970 = vpop.f32.mrb[0].mxu0
        %v971 = vpop.f32.mrb[0].mxu0
        %v972 = vadd.f32 0.0, %v971
        %v973 = vpop.f32.mrb[0].mxu0
        %974 = vdwg.mxu0
        %vm977 = vcmask 1040384
        %v978 = vrot.slane %v926, 7
        %v979 = vrot.slane %v930, 7
        %v980 = vsel %vm977, %v978, %v979
        %v983 = vsel %vm977, 0.0, %v978
        %v984 = vadd.f32 %v983, 0.0
        %v985 = vadd.f32 %v980, 0.0
        %v988 = vrot.slane %v928, 7
        %v989 = vrot.slane %v932, 7
        %v990 = vsel %vm977, %v988, %v989
        %v993 = vsel %vm977, 0.0, %v988
        %v994 = vsel %vm977, %v989, 0.0
        %vm997 = vcmask 1046528
        %v998 = vrot.slane %v993, 1
        %v999 = vrot.slane %v990, 1
        %v1000 = vsel %vm997, %v998, %v999
        %v1001 = vrot.slane %v994, 1
        %v1002 = vsel %vm997, %v999, %v1001
        %v1005 = vadd.f32 %v984, %v1000
        %v1006 = vadd.f32 %v985, %v1002
        %v1009 = vrot.slane %v969, 7
        %v1010 = vrot.slane %v972, 7
        %v1011 = vsel %vm977, %v1009, %v1010
        %v1014 = vsel %vm977, 0.0, %v1009
        %v1015 = vsel %vm977, %v1010, 0.0
        %vm1018 = vcmask 1045504
        %v1019 = vrot.slane %v1014, 2
        %v1020 = vrot.slane %v1011, 2
        %v1021 = vsel %vm1018, %v1019, %v1020
        %v1022 = vrot.slane %v1015, 2
        %v1023 = vsel %vm1018, %v1020, %v1022
        %v1026 = vadd.f32 %v1005, %v1021
        %v1027 = vadd.f32 %v1006, %v1023
        %v1028 = vld [vmem:[#allocation8] sm:$0x1]
        %v1030 = vlaneseq
        %v1031 = vshrl.u32 %v1030, 7
        %v1032 = vsub.s32 0, %v1031
        %v1033 = vrot.slane %v1028, %v1032
        %v1035 = vmul.f32 %v1026, %v1033
        %v1036 = vmul.f32 %v1027, %v1033
        %v1037 = vld [vmem:[%s6] sm:$0x1]
        %v1039 = vlaneseq
        %v1040 = vshrl.u32 %v1039, 7
        %v1041 = vsub.s32 0, %v1040
        %v1042 = vrot.slane %v1037, %v1041
        %v1044 = vadd.f32 %v1035, %v1042
        %v1045 = vadd.f32 %v1036, %v1042
        %vm1046 = vcmp.gt.f32.partialorder %v1044, 0.0
        %vm1047 = vcmp.gt.f32.partialorder %v1045, 0.0
        %v1048 = vmul.f32 %v1044, 0.01
        %v1049 = vmul.f32 %v1045, 0.01
        %v1050 = vsel %vm1046, %v1044, %v1048
        %v1051 = vsel %vm1047, %v1045, %v1049
        %v1052 = vpack.c.bf16 %v1051, %v1050
        %v1053 = vld [vmem:[#allocation10] sm:$0xff]
        %v1054 = vld [vmem:[#allocation10 + $0x8] sm:$0xff]
        %v1055 = vld [vmem:[#allocation10 + $0x10] sm:$0xff]
        %v1056 = vld [vmem:[#allocation10 + $0x18] sm:$0xff]
        %v1057 = vld [vmem:[#allocation10 + $0x20] sm:$0xff]
        %v1058 = vld [vmem:[#allocation10 + $0x28] sm:$0xff]
        %v1059 = vld [vmem:[#allocation10 + $0x30] sm:$0xff]
        %v1060 = vld [vmem:[#allocation10 + $0x38] sm:$0xff]
        %v1061 = vld [vmem:[#allocation10 + $0x40] sm:$0xff]
        %v1062 = vld [vmem:[#allocation10 + $0x48] sm:$0xff]
        %v1063 = vld [vmem:[#allocation10 + $0x50] sm:$0xff]
        %v1064 = vld [vmem:[#allocation10 + $0x58] sm:$0xff]
        %v1065 = vld [vmem:[#allocation10 + $0x60] sm:$0xff]
        %v1066 = vld [vmem:[#allocation10 + $0x68] sm:$0xff]
        %v1067 = vld [vmem:[#allocation10 + $0x70] sm:$0xff]
        %v1068 = vld [vmem:[#allocation10 + $0x78] sm:$0xff]
        %v1069 = vld [vmem:[#allocation10 + $0x80] sm:$0xff]
        %v1070 = vld [vmem:[#allocation10 + $0x88] sm:$0xff]
        %v1071 = vld [vmem:[#allocation10 + $0x90] sm:$0xff]
        %v1072 = vld [vmem:[#allocation10 + $0x98] sm:$0xff]
        %v1073 = vld [vmem:[#allocation10 + $0xa0] sm:$0xff]
        %v1074 = vld [vmem:[#allocation10 + $0xa8] sm:$0xff]
        %v1075 = vld [vmem:[#allocation10 + $0xb0] sm:$0xff]
        %v1076 = vld [vmem:[#allocation10 + $0xb8] sm:$0xff]
        %v1077 = vld [vmem:[#allocation10 + $0xc0] sm:$0xff]
        %v1078 = vld [vmem:[#allocation10 + $0xc8] sm:$0xff]
        %v1079 = vld [vmem:[#allocation10 + $0xd0] sm:$0xff]
        %v1080 = vld [vmem:[#allocation10 + $0xd8] sm:$0xff]
        %v1081 = vld [vmem:[#allocation10 + $0xe0] sm:$0xff]
        %v1082 = vld [vmem:[#allocation10 + $0xe8] sm:$0xff]
        %v1083 = vld [vmem:[#allocation10 + $0xf0] sm:$0xff]
        %v1084 = vld [vmem:[#allocation10 + $0xf8] sm:$0xff]
        %v1117 = vunpack.c.l.b16 %v1053
        %v1118 = vunpack.c.h.b16 %v1053
        %v1119 = vunpack.c.l.b16 %v1054
        %v1120 = vunpack.c.h.b16 %v1054
        %v1121 = vunpack.c.l.b16 %v1055
        %v1122 = vunpack.c.h.b16 %v1055
        %v1123 = vunpack.c.l.b16 %v1056
        %v1124 = vunpack.c.h.b16 %v1056
        %v1125 = vunpack.c.l.b16 %v1057
        %v1126 = vunpack.c.h.b16 %v1057
        %v1127 = vunpack.c.l.b16 %v1058
        %v1128 = vunpack.c.h.b16 %v1058
        %v1129 = vunpack.c.l.b16 %v1059
        %v1130 = vunpack.c.h.b16 %v1059
        %v1131 = vunpack.c.l.b16 %v1060
        %v1132 = vunpack.c.h.b16 %v1060
        %v1133 = vunpack.c.l.b16 %v1061
        %v1134 = vunpack.c.h.b16 %v1061
        %v1135 = vunpack.c.l.b16 %v1062
        %v1136 = vunpack.c.h.b16 %v1062
        %v1137 = vunpack.c.l.b16 %v1063
        %v1138 = vunpack.c.h.b16 %v1063
        %v1139 = vunpack.c.l.b16 %v1064
        %v1140 = vunpack.c.h.b16 %v1064
        %v1141 = vunpack.c.l.b16 %v1065
        %v1142 = vunpack.c.h.b16 %v1065
        %v1143 = vunpack.c.l.b16 %v1066
        %v1144 = vunpack.c.h.b16 %v1066
        %v1145 = vunpack.c.l.b16 %v1067
        %v1146 = vunpack.c.h.b16 %v1067
        %v1147 = vunpack.c.l.b16 %v1068
        %v1148 = vunpack.c.h.b16 %v1068
        %v1149 = vunpack.c.l.b16 %v1069
        %v1150 = vunpack.c.h.b16 %v1069
        %v1151 = vunpack.c.l.b16 %v1070
        %v1152 = vunpack.c.h.b16 %v1070
        %v1153 = vunpack.c.l.b16 %v1071
        %v1154 = vunpack.c.h.b16 %v1071
        %v1155 = vunpack.c.l.b16 %v1072
        %v1156 = vunpack.c.h.b16 %v1072
        %v1157 = vunpack.c.l.b16 %v1073
        %v1158 = vunpack.c.h.b16 %v1073
        %v1159 = vunpack.c.l.b16 %v1074
        %v1160 = vunpack.c.h.b16 %v1074
        %v1161 = vunpack.c.l.b16 %v1075
        %v1162 = vunpack.c.h.b16 %v1075
        %v1163 = vunpack.c.l.b16 %v1076
        %v1164 = vunpack.c.h.b16 %v1076
        %v1165 = vunpack.c.l.b16 %v1077
        %v1166 = vunpack.c.h.b16 %v1077
        %v1167 = vunpack.c.l.b16 %v1078
        %v1168 = vunpack.c.h.b16 %v1078
        %v1169 = vunpack.c.l.b16 %v1079
        %v1170 = vunpack.c.h.b16 %v1079
        %v1171 = vunpack.c.l.b16 %v1080
        %v1172 = vunpack.c.h.b16 %v1080
        %v1173 = vunpack.c.l.b16 %v1081
        %v1174 = vunpack.c.h.b16 %v1081
        %v1175 = vunpack.c.l.b16 %v1082
        %v1176 = vunpack.c.h.b16 %v1082
        %v1177 = vunpack.c.l.b16 %v1083
        %v1178 = vunpack.c.h.b16 %v1083
        %v1179 = vunpack.c.l.b16 %v1084
        %v1180 = vunpack.c.h.b16 %v1084
        %v1181 = vpack.c.b16 %v1121, %v1117
        %v1182 = vpack.c.b16 %v1122, %v1118
        %v1183 = vpack.c.b16 %v1123, %v1119
        %v1184 = vpack.c.b16 %v1124, %v1120
        %v1185 = vpack.c.b16 %v1129, %v1125
        %v1186 = vpack.c.b16 %v1130, %v1126
        %v1187 = vpack.c.b16 %v1131, %v1127
        %v1188 = vpack.c.b16 %v1132, %v1128
        %v1189 = vpack.c.b16 %v1137, %v1133
        %v1190 = vpack.c.b16 %v1138, %v1134
        %v1191 = vpack.c.b16 %v1139, %v1135
        %v1192 = vpack.c.b16 %v1140, %v1136
        %v1193 = vpack.c.b16 %v1145, %v1141
        %v1194 = vpack.c.b16 %v1146, %v1142
        %v1195 = vpack.c.b16 %v1147, %v1143
        %v1196 = vpack.c.b16 %v1148, %v1144
        %v1197 = vpack.c.b16 %v1153, %v1149
        %v1198 = vpack.c.b16 %v1154, %v1150
        %v1199 = vpack.c.b16 %v1155, %v1151
        %v1200 = vpack.c.b16 %v1156, %v1152
        %v1201 = vpack.c.b16 %v1161, %v1157
        %v1202 = vpack.c.b16 %v1162, %v1158
        %v1203 = vpack.c.b16 %v1163, %v1159
        %v1204 = vpack.c.b16 %v1164, %v1160
        %v1205 = vpack.c.b16 %v1169, %v1165
        %v1206 = vpack.c.b16 %v1170, %v1166
        %v1207 = vpack.c.b16 %v1171, %v1167
        %v1208 = vpack.c.b16 %v1172, %v1168
        %v1209 = vpack.c.b16 %v1177, %v1173
        %v1210 = vpack.c.b16 %v1178, %v1174
        %v1211 = vpack.c.b16 %v1179, %v1175
        %v1212 = vpack.c.b16 %v1180, %v1176
        %1245 = vmatprep.subr.bf16.mxu0 %v1182
        %1246 = vmatpush1.bf16.msra.mxu0 %v1181
        %1247 = vmatprep.subr.bf16.mxu0 %v1186
        %1248 = vmatpush1.bf16.msra.mxu0 %v1185
        %1249 = vmatprep.subr.bf16.mxu0 %v1190
        %1250 = vmatpush1.bf16.msra.mxu0 %v1189
        %1251 = vmatprep.subr.bf16.mxu0 %v1194
        %1252 = vmatpush1.bf16.msra.mxu0 %v1193
        %1253 = vmatprep.subr.bf16.mxu0 %v1198
        %1254 = vmatpush1.bf16.msra.mxu0 %v1197
        %1255 = vmatprep.subr.bf16.mxu0 %v1202
        %1256 = vmatpush1.bf16.msra.mxu0 %v1201
        %1257 = vmatprep.subr.bf16.mxu0 %v1206
        %1258 = vmatpush1.bf16.msra.mxu0 %v1205
        %1259 = vmatprep.subr.bf16.mxu0 %v1210
        %1260 = vmatpush1.bf16.msra.mxu0 %v1209
        %1261 = vmatprep.subr.bf16.mxu0 0
        %1262 = vmatpush1.bf16.msra.mxu0 0
        %1263 = vmatprep.subr.bf16.mxu0 0
        %1264 = vmatpush1.bf16.msra.mxu0 0
        %1265 = vmatprep.subr.bf16.mxu0 0
        %1266 = vmatpush1.bf16.msra.mxu0 0
        %1267 = vmatprep.subr.bf16.mxu0 0
        %1268 = vmatpush1.bf16.msra.mxu0 0
        %1269 = vmatprep.subr.bf16.mxu0 0
        %1270 = vmatpush1.bf16.msra.mxu0 0
        %1271 = vmatprep.subr.bf16.mxu0 0
        %1272 = vmatpush1.bf16.msra.mxu0 0
        %1273 = vmatprep.subr.bf16.mxu0 0
        %1274 = vmatpush1.bf16.msra.mxu0 0
        %1275 = vmatprep.subr.bf16.mxu0 0
        %1276 = vmatpush1.bf16.msra.mxu0 0
        %1277 = vmatprep.mubr.bf16.mxu0 0
        %1278 = vmatmul.mubr.bf16.gmra.mrb[0].mxu0 %v1052
        %v1279 = vpop.f32.mrb[0].mxu0
        %v1280 = vadd.f32 0.0, %v1279
        %v1281 = vpop.f32.mrb[0].mxu0
        %v1282 = vadd.f32 0.0, %v1281
        %v1283 = vpop.f32.mrb[0].mxu0
        %v1284 = vadd.f32 0.0, %v1283
        %v1285 = vpop.f32.mrb[0].mxu0
        %v1286 = vadd.f32 0.0, %v1285
        %1287 = vdwg.mxu0
        %1288 = vmatprep.subr.bf16.mxu0 %v1184
        %1289 = vmatpush1.bf16.msra.mxu0 %v1183
        %1290 = vmatprep.subr.bf16.mxu0 %v1188
        %1291 = vmatpush1.bf16.msra.mxu0 %v1187
        %1292 = vmatprep.subr.bf16.mxu0 %v1192
        %1293 = vmatpush1.bf16.msra.mxu0 %v1191
        %1294 = vmatprep.subr.bf16.mxu0 %v1196
        %1295 = vmatpush1.bf16.msra.mxu0 %v1195
        %1296 = vmatprep.subr.bf16.mxu0 %v1200
        %1297 = vmatpush1.bf16.msra.mxu0 %v1199
        %1298 = vmatprep.subr.bf16.mxu0 %v1204
        %1299 = vmatpush1.bf16.msra.mxu0 %v1203
        %1300 = vmatprep.subr.bf16.mxu0 %v1208
        %1301 = vmatpush1.bf16.msra.mxu0 %v1207
        %1302 = vmatprep.subr.bf16.mxu0 %v1212
        %1303 = vmatpush1.bf16.msra.mxu0 %v1211
        %1304 = vmatprep.subr.bf16.mxu0 0
        %1305 = vmatpush1.bf16.msra.mxu0 0
        %1306 = vmatprep.subr.bf16.mxu0 0
        %1307 = vmatpush1.bf16.msra.mxu0 0
        %1308 = vmatprep.subr.bf16.mxu0 0
        %1309 = vmatpush1.bf16.msra.mxu0 0
        %1310 = vmatprep.subr.bf16.mxu0 0
        %1311 = vmatpush1.bf16.msra.mxu0 0
        %1312 = vmatprep.subr.bf16.mxu0 0
        %1313 = vmatpush1.bf16.msra.mxu0 0
        %1314 = vmatprep.subr.bf16.mxu0 0
        %1315 = vmatpush1.bf16.msra.mxu0 0
        %1316 = vmatprep.subr.bf16.mxu0 0
        %1317 = vmatpush1.bf16.msra.mxu0 0
        %1318 = vmatprep.subr.bf16.mxu0 0
        %1319 = vmatpush1.bf16.msra.mxu0 0
        %1320 = vmatprep.mubr.bf16.mxu0 0
        %1321 = vmatmul.mubr.bf16.gmra.mrb[0].mxu0 %v1052
        %v1322 = vpop.f32.mrb[0].mxu0
        %v1323 = vadd.f32 0.0, %v1322
        %v1324 = vpop.f32.mrb[0].mxu0
        %v1325 = vadd.f32 0.0, %v1324
        %v1326 = vpop.f32.mrb[0].mxu0
        %v1327 = vadd.f32 0.0, %v1326
        %v1328 = vpop.f32.mrb[0].mxu0
        %v1329 = vadd.f32 0.0, %v1328
        %1330 = vdwg.mxu0
        %v1331 = vld [vmem:[%s8] sm:$0xf]
        %v1333 = vlaneseq
        %v1334 = vshrl.u32 %v1333, 7
        %v1335 = vsub.s32 0, %v1334
        %v1336 = vrot.slane %v1331, %v1335
        %v1337 = vlaneseq
        %v1338 = vshrl.u32 %v1337, 7
        %v1339 = vsub.s32 1, %v1338
        %v1340 = vrot.slane %v1331, %v1339
        %v1341 = vlaneseq
        %v1342 = vshrl.u32 %v1341, 7
        %v1343 = vsub.s32 2, %v1342
        %v1344 = vrot.slane %v1331, %v1343
        %v1345 = vlaneseq
        %v1346 = vshrl.u32 %v1345, 7
        %v1347 = vsub.s32 3, %v1346
        %v1348 = vrot.slane %v1331, %v1347
        %v1353 = vmul.f32 %v1280, %v1336
        %v1354 = vmul.f32 %v1282, %v1340
        %v1355 = vmul.f32 %v1323, %v1344
        %v1356 = vmul.f32 %v1325, %v1348
        %v1357 = vmul.f32 %v1284, %v1336
        %v1358 = vmul.f32 %v1286, %v1340
        %v1359 = vmul.f32 %v1327, %v1344
        %v1360 = vmul.f32 %v1329, %v1348
        %v1361 = vld [vmem:[%s9] sm:$0xf]
        %v1363 = vlaneseq
        %v1364 = vshrl.u32 %v1363, 7
        %v1365 = vsub.s32 0, %v1364
        %v1366 = vrot.slane %v1361, %v1365
        %v1367 = vlaneseq
        %v1368 = vshrl.u32 %v1367, 7
        %v1369 = vsub.s32 1, %v1368
        %v1370 = vrot.slane %v1361, %v1369
        %v1371 = vlaneseq
        %v1372 = vshrl.u32 %v1371, 7
        %v1373 = vsub.s32 2, %v1372
        %v1374 = vrot.slane %v1361, %v1373
        %v1375 = vlaneseq
        %v1376 = vshrl.u32 %v1375, 7
        %v1377 = vsub.s32 3, %v1376
        %v1378 = vrot.slane %v1361, %v1377
        %v1383 = vadd.f32 %v1353, %v1366
        %v1384 = vadd.f32 %v1354, %v1370
        %v1385 = vadd.f32 %v1355, %v1374
        %v1386 = vadd.f32 %v1356, %v1378
        %v1387 = vadd.f32 %v1357, %v1366
        %v1388 = vadd.f32 %v1358, %v1370
        %v1389 = vadd.f32 %v1359, %v1374
        %v1390 = vadd.f32 %v1360, %v1378
        %v1391 = vld [vmem:[#allocation11] sm:$0xff]
        %v1392 = vld [vmem:[#allocation11 + $0x8] sm:$0xff]
        %v1393 = vld [vmem:[#allocation11 + $0x10] sm:$0xff]
        %v1394 = vld [vmem:[#allocation11 + $0x18] sm:$0xff]
        %v1395 = vld [vmem:[#allocation11 + $0x20] sm:$0xff]
        %v1396 = vld [vmem:[#allocation11 + $0x28] sm:$0xff]
        %v1397 = vld [vmem:[#allocation11 + $0x30] sm:$0xff]
        %v1398 = vld [vmem:[#allocation11 + $0x38] sm:$0xff]
        %v1399 = vld [vmem:[#allocation11 + $0x40] sm:$0xff]
        %v1400 = vld [vmem:[#allocation11 + $0x48] sm:$0xff]
        %v1401 = vld [vmem:[#allocation11 + $0x50] sm:$0xff]
        %v1402 = vld [vmem:[#allocation11 + $0x58] sm:$0xff]
        %v1403 = vld [vmem:[#allocation11 + $0x60] sm:$0xff]
        %v1404 = vld [vmem:[#allocation11 + $0x68] sm:$0xff]
        %v1405 = vld [vmem:[#allocation11 + $0x70] sm:$0xff]
        %v1406 = vld [vmem:[#allocation11 + $0x78] sm:$0xff]
        %v1407 = vld [vmem:[#allocation11 + $0x80] sm:$0xff]
        %v1408 = vld [vmem:[#allocation11 + $0x88] sm:$0xff]
        %v1409 = vld [vmem:[#allocation11 + $0x90] sm:$0xff]
        %v1410 = vld [vmem:[#allocation11 + $0x98] sm:$0xff]
        %v1411 = vld [vmem:[#allocation11 + $0xa0] sm:$0xff]
        %v1412 = vld [vmem:[#allocation11 + $0xa8] sm:$0xff]
        %v1413 = vld [vmem:[#allocation11 + $0xb0] sm:$0xff]
        %v1414 = vld [vmem:[#allocation11 + $0xb8] sm:$0xff]
        %v1415 = vld [vmem:[#allocation11 + $0xc0] sm:$0xff]
        %v1416 = vld [vmem:[#allocation11 + $0xc8] sm:$0xff]
        %v1417 = vld [vmem:[#allocation11 + $0xd0] sm:$0xff]
        %v1418 = vld [vmem:[#allocation11 + $0xd8] sm:$0xff]
        %v1419 = vld [vmem:[#allocation11 + $0xe0] sm:$0xff]
        %v1420 = vld [vmem:[#allocation11 + $0xe8] sm:$0xff]
        %v1421 = vld [vmem:[#allocation11 + $0xf0] sm:$0xff]
        %v1422 = vld [vmem:[#allocation11 + $0xf8] sm:$0xff]
        %v1423 = vld [vmem:[#allocation11 + $0x100] sm:$0xff]
        %v1424 = vld [vmem:[#allocation11 + $0x108] sm:$0xff]
        %v1425 = vld [vmem:[#allocation11 + $0x110] sm:$0xff]
        %v1426 = vld [vmem:[#allocation11 + $0x118] sm:$0xff]
        %v1427 = vld [vmem:[#allocation11 + $0x120] sm:$0xff]
        %v1428 = vld [vmem:[#allocation11 + $0x128] sm:$0xff]
        %v1429 = vld [vmem:[#allocation11 + $0x130] sm:$0xff]
        %v1430 = vld [vmem:[#allocation11 + $0x138] sm:$0xff]
        %v1431 = vld [vmem:[#allocation11 + $0x140] sm:$0xff]
        %v1432 = vld [vmem:[#allocation11 + $0x148] sm:$0xff]
        %v1433 = vld [vmem:[#allocation11 + $0x150] sm:$0xff]
        %v1434 = vld [vmem:[#allocation11 + $0x158] sm:$0xff]
        %v1435 = vld [vmem:[#allocation11 + $0x160] sm:$0xff]
        %v1436 = vld [vmem:[#allocation11 + $0x168] sm:$0xff]
        %v1437 = vld [vmem:[#allocation11 + $0x170] sm:$0xff]
        %v1438 = vld [vmem:[#allocation11 + $0x178] sm:$0xff]
        %v1439 = vld [vmem:[#allocation11 + $0x180] sm:$0xff]
        %v1440 = vld [vmem:[#allocation11 + $0x188] sm:$0xff]
        %v1441 = vld [vmem:[#allocation11 + $0x190] sm:$0xff]
        %v1442 = vld [vmem:[#allocation11 + $0x198] sm:$0xff]
        %v1443 = vld [vmem:[#allocation11 + $0x1a0] sm:$0xff]
        %v1444 = vld [vmem:[#allocation11 + $0x1a8] sm:$0xff]
        %v1445 = vld [vmem:[#allocation11 + $0x1b0] sm:$0xff]
        %v1446 = vld [vmem:[#allocation11 + $0x1b8] sm:$0xff]
        %v1447 = vld [vmem:[#allocation11 + $0x1c0] sm:$0xff]
        %v1448 = vld [vmem:[#allocation11 + $0x1c8] sm:$0xff]
        %v1449 = vld [vmem:[#allocation11 + $0x1d0] sm:$0xff]
        %v1450 = vld [vmem:[#allocation11 + $0x1d8] sm:$0xff]
        %v1451 = vld [vmem:[#allocation11 + $0x1e0] sm:$0xff]
        %v1452 = vld [vmem:[#allocation11 + $0x1e8] sm:$0xff]
        %v1453 = vld [vmem:[#allocation11 + $0x1f0] sm:$0xff]
        %v1454 = vld [vmem:[#allocation11 + $0x1f8] sm:$0xff]
        %v1519 = vunpack.c.l.b16 %v1391
        %v1520 = vunpack.c.h.b16 %v1391
        %v1521 = vunpack.c.l.b16 %v1392
        %v1522 = vunpack.c.h.b16 %v1392
        %v1523 = vunpack.c.l.b16 %v1393
        %v1524 = vunpack.c.h.b16 %v1393
        %v1525 = vunpack.c.l.b16 %v1394
        %v1526 = vunpack.c.h.b16 %v1394
        %v1527 = vunpack.c.l.b16 %v1395
        %v1528 = vunpack.c.h.b16 %v1395
        %v1529 = vunpack.c.l.b16 %v1396
        %v1530 = vunpack.c.h.b16 %v1396
        %v1531 = vunpack.c.l.b16 %v1397
        %v1532 = vunpack.c.h.b16 %v1397
        %v1533 = vunpack.c.l.b16 %v1398
        %v1534 = vunpack.c.h.b16 %v1398
        %v1535 = vunpack.c.l.b16 %v1399
        %v1536 = vunpack.c.h.b16 %v1399
        %v1537 = vunpack.c.l.b16 %v1400
        %v1538 = vunpack.c.h.b16 %v1400
        %v1539 = vunpack.c.l.b16 %v1401
        %v1540 = vunpack.c.h.b16 %v1401
        %v1541 = vunpack.c.l.b16 %v1402
        %v1542 = vunpack.c.h.b16 %v1402
        %v1543 = vunpack.c.l.b16 %v1403
        %v1544 = vunpack.c.h.b16 %v1403
        %v1545 = vunpack.c.l.b16 %v1404
        %v1546 = vunpack.c.h.b16 %v1404
        %v1547 = vunpack.c.l.b16 %v1405
        %v1548 = vunpack.c.h.b16 %v1405
        %v1549 = vunpack.c.l.b16 %v1406
        %v1550 = vunpack.c.h.b16 %v1406
        %v1551 = vunpack.c.l.b16 %v1407
        %v1552 = vunpack.c.h.b16 %v1407
        %v1553 = vunpack.c.l.b16 %v1408
        %v1554 = vunpack.c.h.b16 %v1408
        %v1555 = vunpack.c.l.b16 %v1409
        %v1556 = vunpack.c.h.b16 %v1409
        %v1557 = vunpack.c.l.b16 %v1410
        %v1558 = vunpack.c.h.b16 %v1410
        %v1559 = vunpack.c.l.b16 %v1411
        %v1560 = vunpack.c.h.b16 %v1411
        %v1561 = vunpack.c.l.b16 %v1412
        %v1562 = vunpack.c.h.b16 %v1412
        %v1563 = vunpack.c.l.b16 %v1413
        %v1564 = vunpack.c.h.b16 %v1413
        %v1565 = vunpack.c.l.b16 %v1414
        %v1566 = vunpack.c.h.b16 %v1414
        %v1567 = vunpack.c.l.b16 %v1415
        %v1568 = vunpack.c.h.b16 %v1415
        %v1569 = vunpack.c.l.b16 %v1416
        %v1570 = vunpack.c.h.b16 %v1416
        %v1571 = vunpack.c.l.b16 %v1417
        %v1572 = vunpack.c.h.b16 %v1417
        %v1573 = vunpack.c.l.b16 %v1418
        %v1574 = vunpack.c.h.b16 %v1418
        %v1575 = vunpack.c.l.b16 %v1419
        %v1576 = vunpack.c.h.b16 %v1419
        %v1577 = vunpack.c.l.b16 %v1420
        %v1578 = vunpack.c.h.b16 %v1420
        %v1579 = vunpack.c.l.b16 %v1421
        %v1580 = vunpack.c.h.b16 %v1421
        %v1581 = vunpack.c.l.b16 %v1422
        %v1582 = vunpack.c.h.b16 %v1422
        %v1583 = vunpack.c.l.b16 %v1423
        %v1584 = vunpack.c.h.b16 %v1423
        %v1585 = vunpack.c.l.b16 %v1424
        %v1586 = vunpack.c.h.b16 %v1424
        %v1587 = vunpack.c.l.b16 %v1425
        %v1588 = vunpack.c.h.b16 %v1425
        %v1589 = vunpack.c.l.b16 %v1426
        %v1590 = vunpack.c.h.b16 %v1426
        %v1591 = vunpack.c.l.b16 %v1427
        %v1592 = vunpack.c.h.b16 %v1427
        %v1593 = vunpack.c.l.b16 %v1428
        %v1594 = vunpack.c.h.b16 %v1428
        %v1595 = vunpack.c.l.b16 %v1429
        %v1596 = vunpack.c.h.b16 %v1429
        %v1597 = vunpack.c.l.b16 %v1430
        %v1598 = vunpack.c.h.b16 %v1430
        %v1599 = vunpack.c.l.b16 %v1431
        %v1600 = vunpack.c.h.b16 %v1431
        %v1601 = vunpack.c.l.b16 %v1432
        %v1602 = vunpack.c.h.b16 %v1432
        %v1603 = vunpack.c.l.b16 %v1433
        %v1604 = vunpack.c.h.b16 %v1433
        %v1605 = vunpack.c.l.b16 %v1434
        %v1606 = vunpack.c.h.b16 %v1434
        %v1607 = vunpack.c.l.b16 %v1435
        %v1608 = vunpack.c.h.b16 %v1435
        %v1609 = vunpack.c.l.b16 %v1436
        %v1610 = vunpack.c.h.b16 %v1436
        %v1611 = vunpack.c.l.b16 %v1437
        %v1612 = vunpack.c.h.b16 %v1437
        %v1613 = vunpack.c.l.b16 %v1438
        %v1614 = vunpack.c.h.b16 %v1438
        %v1615 = vunpack.c.l.b16 %v1439
        %v1616 = vunpack.c.h.b16 %v1439
        %v1617 = vunpack.c.l.b16 %v1440
        %v1618 = vunpack.c.h.b16 %v1440
        %v1619 = vunpack.c.l.b16 %v1441
        %v1620 = vunpack.c.h.b16 %v1441
        %v1621 = vunpack.c.l.b16 %v1442
        %v1622 = vunpack.c.h.b16 %v1442
        %v1623 = vunpack.c.l.b16 %v1443
        %v1624 = vunpack.c.h.b16 %v1443
        %v1625 = vunpack.c.l.b16 %v1444
        %v1626 = vunpack.c.h.b16 %v1444
        %v1627 = vunpack.c.l.b16 %v1445
        %v1628 = vunpack.c.h.b16 %v1445
        %v1629 = vunpack.c.l.b16 %v1446
        %v1630 = vunpack.c.h.b16 %v1446
        %v1631 = vunpack.c.l.b16 %v1447
        %v1632 = vunpack.c.h.b16 %v1447
        %v1633 = vunpack.c.l.b16 %v1448
        %v1634 = vunpack.c.h.b16 %v1448
        %v1635 = vunpack.c.l.b16 %v1449
        %v1636 = vunpack.c.h.b16 %v1449
        %v1637 = vunpack.c.l.b16 %v1450
        %v1638 = vunpack.c.h.b16 %v1450
        %v1639 = vunpack.c.l.b16 %v1451
        %v1640 = vunpack.c.h.b16 %v1451
        %v1641 = vunpack.c.l.b16 %v1452
        %v1642 = vunpack.c.h.b16 %v1452
        %v1643 = vunpack.c.l.b16 %v1453
        %v1644 = vunpack.c.h.b16 %v1453
        %v1645 = vunpack.c.l.b16 %v1454
        %v1646 = vunpack.c.h.b16 %v1454
        %v1647 = vpack.c.b16 %v1523, %v1519
        %v1648 = vpack.c.b16 %v1524, %v1520
        %v1649 = vpack.c.b16 %v1525, %v1521
        %v1650 = vpack.c.b16 %v1526, %v1522
        %v1651 = vpack.c.b16 %v1531, %v1527
        %v1652 = vpack.c.b16 %v1532, %v1528
        %v1653 = vpack.c.b16 %v1533, %v1529
        %v1654 = vpack.c.b16 %v1534, %v1530
        %v1655 = vpack.c.b16 %v1539, %v1535
        %v1656 = vpack.c.b16 %v1540, %v1536
        %v1657 = vpack.c.b16 %v1541, %v1537
        %v1658 = vpack.c.b16 %v1542, %v1538
        %v1659 = vpack.c.b16 %v1547, %v1543
        %v1660 = vpack.c.b16 %v1548, %v1544
        %v1661 = vpack.c.b16 %v1549, %v1545
        %v1662 = vpack.c.b16 %v1550, %v1546
        %v1663 = vpack.c.b16 %v1555, %v1551
        %v1664 = vpack.c.b16 %v1556, %v1552
        %v1665 = vpack.c.b16 %v1557, %v1553
        %v1666 = vpack.c.b16 %v1558, %v1554
        %v1667 = vpack.c.b16 %v1563, %v1559
        %v1668 = vpack.c.b16 %v1564, %v1560
        %v1669 = vpack.c.b16 %v1565, %v1561
        %v1670 = vpack.c.b16 %v1566, %v1562
        %v1671 = vpack.c.b16 %v1571, %v1567
        %v1672 = vpack.c.b16 %v1572, %v1568
        %v1673 = vpack.c.b16 %v1573, %v1569
        %v1674 = vpack.c.b16 %v1574, %v1570
        %v1675 = vpack.c.b16 %v1579, %v1575
        %v1676 = vpack.c.b16 %v1580, %v1576
        %v1677 = vpack.c.b16 %v1581, %v1577
        %v1678 = vpack.c.b16 %v1582, %v1578
        %v1679 = vpack.c.b16 %v1587, %v1583
        %v1680 = vpack.c.b16 %v1588, %v1584
        %v1681 = vpack.c.b16 %v1589, %v1585
        %v1682 = vpack.c.b16 %v1590, %v1586
        %v1683 = vpack.c.b16 %v1595, %v1591
        %v1684 = vpack.c.b16 %v1596, %v1592
        %v1685 = vpack.c.b16 %v1597, %v1593
        %v1686 = vpack.c.b16 %v1598, %v1594
        %v1687 = vpack.c.b16 %v1603, %v1599
        %v1688 = vpack.c.b16 %v1604, %v1600
        %v1689 = vpack.c.b16 %v1605, %v1601
        %v1690 = vpack.c.b16 %v1606, %v1602
        %v1691 = vpack.c.b16 %v1611, %v1607
        %v1692 = vpack.c.b16 %v1612, %v1608
        %v1693 = vpack.c.b16 %v1613, %v1609
        %v1694 = vpack.c.b16 %v1614, %v1610
        %v1695 = vpack.c.b16 %v1619, %v1615
        %v1696 = vpack.c.b16 %v1620, %v1616
        %v1697 = vpack.c.b16 %v1621, %v1617
        %v1698 = vpack.c.b16 %v1622, %v1618
        %v1699 = vpack.c.b16 %v1627, %v1623
        %v1700 = vpack.c.b16 %v1628, %v1624
        %v1701 = vpack.c.b16 %v1629, %v1625
        %v1702 = vpack.c.b16 %v1630, %v1626
        %v1703 = vpack.c.b16 %v1635, %v1631
        %v1704 = vpack.c.b16 %v1636, %v1632
        %v1705 = vpack.c.b16 %v1637, %v1633
        %v1706 = vpack.c.b16 %v1638, %v1634
        %v1707 = vpack.c.b16 %v1643, %v1639
        %v1708 = vpack.c.b16 %v1644, %v1640
        %v1709 = vpack.c.b16 %v1645, %v1641
        %v1710 = vpack.c.b16 %v1646, %v1642
        %1775 = vmatprep.subr.bf16.mxu0 %v1648
        %1776 = vmatpush1.bf16.msra.mxu0 %v1647
        %1777 = vmatprep.subr.bf16.mxu0 %v1652
        %1778 = vmatpush1.bf16.msra.mxu0 %v1651
        %1779 = vmatprep.subr.bf16.mxu0 %v1656
        %1780 = vmatpush1.bf16.msra.mxu0 %v1655
        %1781 = vmatprep.subr.bf16.mxu0 %v1660
        %1782 = vmatpush1.bf16.msra.mxu0 %v1659
        %1783 = vmatprep.subr.bf16.mxu0 %v1664
        %1784 = vmatpush1.bf16.msra.mxu0 %v1663
        %1785 = vmatprep.subr.bf16.mxu0 %v1668
        %1786 = vmatpush1.bf16.msra.mxu0 %v1667
        %1787 = vmatprep.subr.bf16.mxu0 %v1672
        %1788 = vmatpush1.bf16.msra.mxu0 %v1671
        %1789 = vmatprep.subr.bf16.mxu0 %v1676
        %1790 = vmatpush1.bf16.msra.mxu0 %v1675
        %1791 = vmatprep.subr.bf16.mxu0 %v1680
        %1792 = vmatpush1.bf16.msra.mxu0 %v1679
        %1793 = vmatprep.subr.bf16.mxu0 %v1684
        %1794 = vmatpush1.bf16.msra.mxu0 %v1683
        %1795 = vmatprep.subr.bf16.mxu0 %v1688
        %1796 = vmatpush1.bf16.msra.mxu0 %v1687
        %1797 = vmatprep.subr.bf16.mxu0 %v1692
        %1798 = vmatpush1.bf16.msra.mxu0 %v1691
        %1799 = vmatprep.subr.bf16.mxu0 %v1696
        %1800 = vmatpush1.bf16.msra.mxu0 %v1695
        %1801 = vmatprep.subr.bf16.mxu0 %v1700
        %1802 = vmatpush1.bf16.msra.mxu0 %v1699
        %1803 = vmatprep.subr.bf16.mxu0 %v1704
        %1804 = vmatpush1.bf16.msra.mxu0 %v1703
        %1805 = vmatprep.subr.bf16.mxu0 %v1708
        %1806 = vmatpush1.bf16.msra.mxu0 %v1707
        %1807 = vmatprep.mubr.bf16.mxu0 %v536
        %1808 = vmatmul.mubr.bf16.gmra.mrb[0].mxu0 %v535
        %v1809 = vpop.f32.mrb[0].mxu0
        %v1810 = vadd.f32 0.0, %v1809
        %v1811 = vpop.f32.mrb[0].mxu0
        %v1812 = vadd.f32 0.0, %v1811
        %v1813 = vpop.f32.mrb[0].mxu0
        %v1814 = vadd.f32 0.0, %v1813
        %v1815 = vpop.f32.mrb[0].mxu0
        %v1816 = vadd.f32 0.0, %v1815
        %1817 = vdwg.mxu0
        %1818 = vmatprep.subr.bf16.mxu0 %v1650
        %1819 = vmatpush1.bf16.msra.mxu0 %v1649
        %1820 = vmatprep.subr.bf16.mxu0 %v1654
        %1821 = vmatpush1.bf16.msra.mxu0 %v1653
        %1822 = vmatprep.subr.bf16.mxu0 %v1658
        %1823 = vmatpush1.bf16.msra.mxu0 %v1657
        %1824 = vmatprep.subr.bf16.mxu0 %v1662
        %1825 = vmatpush1.bf16.msra.mxu0 %v1661
        %1826 = vmatprep.subr.bf16.mxu0 %v1666
        %1827 = vmatpush1.bf16.msra.mxu0 %v1665
        %1828 = vmatprep.subr.bf16.mxu0 %v1670
        %1829 = vmatpush1.bf16.msra.mxu0 %v1669
        %1830 = vmatprep.subr.bf16.mxu0 %v1674
        %1831 = vmatpush1.bf16.msra.mxu0 %v1673
        %1832 = vmatprep.subr.bf16.mxu0 %v1678
        %1833 = vmatpush1.bf16.msra.mxu0 %v1677
        %1834 = vmatprep.subr.bf16.mxu0 %v1682
        %1835 = vmatpush1.bf16.msra.mxu0 %v1681
        %1836 = vmatprep.subr.bf16.mxu0 %v1686
        %1837 = vmatpush1.bf16.msra.mxu0 %v1685
        %1838 = vmatprep.subr.bf16.mxu0 %v1690
        %1839 = vmatpush1.bf16.msra.mxu0 %v1689
        %1840 = vmatprep.subr.bf16.mxu0 %v1694
        %1841 = vmatpush1.bf16.msra.mxu0 %v1693
        %1842 = vmatprep.subr.bf16.mxu0 %v1698
        %1843 = vmatpush1.bf16.msra.mxu0 %v1697
        %1844 = vmatprep.subr.bf16.mxu0 %v1702
        %1845 = vmatpush1.bf16.msra.mxu0 %v1701
        %1846 = vmatprep.subr.bf16.mxu0 %v1706
        %1847 = vmatpush1.bf16.msra.mxu0 %v1705
        %1848 = vmatprep.subr.bf16.mxu0 %v1710
        %1849 = vmatpush1.bf16.msra.mxu0 %v1709
        %1850 = vmatprep.mubr.bf16.mxu0 %v536
        %1851 = vmatmul.mubr.bf16.gmra.mrb[0].mxu0 %v535
        %v1852 = vpop.f32.mrb[0].mxu0
        %v1853 = vadd.f32 0.0, %v1852
        %v1854 = vpop.f32.mrb[0].mxu0
        %v1855 = vadd.f32 0.0, %v1854
        %v1856 = vpop.f32.mrb[0].mxu0
        %v1857 = vadd.f32 0.0, %v1856
        %v1858 = vpop.f32.mrb[0].mxu0
        %v1859 = vadd.f32 0.0, %v1858
        %1860 = vdwg.mxu0
        %v1861 = vld [vmem:[%s11] sm:$0xf]
        %v1863 = vlaneseq
        %v1864 = vshrl.u32 %v1863, 7
        %v1865 = vsub.s32 0, %v1864
        %v1866 = vrot.slane %v1861, %v1865
        %v1867 = vlaneseq
        %v1868 = vshrl.u32 %v1867, 7
        %v1869 = vsub.s32 1, %v1868
        %v1870 = vrot.slane %v1861, %v1869
        %v1871 = vlaneseq
        %v1872 = vshrl.u32 %v1871, 7
        %v1873 = vsub.s32 2, %v1872
        %v1874 = vrot.slane %v1861, %v1873
        %v1875 = vlaneseq
        %v1876 = vshrl.u32 %v1875, 7
        %v1877 = vsub.s32 3, %v1876
        %v1878 = vrot.slane %v1861, %v1877
        %v1883 = vmul.f32 %v1810, %v1866
        %v1884 = vmul.f32 %v1812, %v1870
        %v1885 = vmul.f32 %v1853, %v1874
        %v1886 = vmul.f32 %v1855, %v1878
        %v1887 = vmul.f32 %v1814, %v1866
        %v1888 = vmul.f32 %v1816, %v1870
        %v1889 = vmul.f32 %v1857, %v1874
        %v1890 = vmul.f32 %v1859, %v1878
        %v1891 = vld [vmem:[%s12] sm:$0xf]
        %v1893 = vlaneseq
        %v1894 = vshrl.u32 %v1893, 7
        %v1895 = vsub.s32 0, %v1894
        %v1896 = vrot.slane %v1891, %v1895
        %v1897 = vlaneseq
        %v1898 = vshrl.u32 %v1897, 7
        %v1899 = vsub.s32 1, %v1898
        %v1900 = vrot.slane %v1891, %v1899
        %v1901 = vlaneseq
        %v1902 = vshrl.u32 %v1901, 7
        %v1903 = vsub.s32 2, %v1902
        %v1904 = vrot.slane %v1891, %v1903
        %v1905 = vlaneseq
        %v1906 = vshrl.u32 %v1905, 7
        %v1907 = vsub.s32 3, %v1906
        %v1908 = vrot.slane %v1891, %v1907
        %v1913 = vadd.f32 %v1883, %v1896
        %v1914 = vadd.f32 %v1884, %v1900
        %v1915 = vadd.f32 %v1885, %v1904
        %v1916 = vadd.f32 %v1886, %v1908
        %v1917 = vadd.f32 %v1887, %v1896
        %v1918 = vadd.f32 %v1888, %v1900
        %v1919 = vadd.f32 %v1889, %v1904
        %v1920 = vadd.f32 %v1890, %v1908
        %v1921 = vadd.f32 %v1383, %v1913
        %v1922 = vadd.f32 %v1384, %v1914
        %v1923 = vadd.f32 %v1385, %v1915
        %v1924 = vadd.f32 %v1386, %v1916
        %v1925 = vadd.f32 %v1387, %v1917
        %v1926 = vadd.f32 %v1388, %v1918
        %v1927 = vadd.f32 %v1389, %v1919
        %v1928 = vadd.f32 %v1390, %v1920
        %vm1929 = vcmp.gt.f32.partialorder %v1921, 0.0
        %vm1930 = vcmp.gt.f32.partialorder %v1922, 0.0
        %vm1931 = vcmp.gt.f32.partialorder %v1923, 0.0
        %vm1932 = vcmp.gt.f32.partialorder %v1924, 0.0
        %vm1933 = vcmp.gt.f32.partialorder %v1925, 0.0
        %vm1934 = vcmp.gt.f32.partialorder %v1926, 0.0
        %vm1935 = vcmp.gt.f32.partialorder %v1927, 0.0
        %vm1936 = vcmp.gt.f32.partialorder %v1928, 0.0
        %v1937 = vmul.f32 %v1921, 0.01
        %v1938 = vmul.f32 %v1922, 0.01
        %v1939 = vmul.f32 %v1923, 0.01
        %v1940 = vmul.f32 %v1924, 0.01
        %v1941 = vmul.f32 %v1925, 0.01
        %v1942 = vmul.f32 %v1926, 0.01
        %v1943 = vmul.f32 %v1927, 0.01
        %v1944 = vmul.f32 %v1928, 0.01
        %v1945 = vsel %vm1929, %v1921, %v1937
        %v1946 = vsel %vm1930, %v1922, %v1938
        %v1947 = vsel %vm1931, %v1923, %v1939
        %v1948 = vsel %vm1932, %v1924, %v1940
        %v1949 = vsel %vm1933, %v1925, %v1941
        %v1950 = vsel %vm1934, %v1926, %v1942
        %v1951 = vsel %vm1935, %v1927, %v1943
        %v1952 = vsel %vm1936, %v1928, %v1944
        %1953 = vst [vmem:[%s529] sm:$0xff] %v1945
        %1954 = vst [vmem:[%s529 + $0x8] sm:$0xff] %v1946
        %1955 = vst [vmem:[%s529 + $0x10] sm:$0xff] %v1947
        %1956 = vst [vmem:[%s529 + $0x18] sm:$0xff] %v1948
        %1957 = vst [vmem:[%s529 + $0x20] sm:$0xff] %v1949
        %1958 = vst [vmem:[%s529 + $0x28] sm:$0xff] %v1950
        %1959 = vst [vmem:[%s529 + $0x30] sm:$0xff] %v1951
        %1960 = vst [vmem:[%s529 + $0x38] sm:$0xff] %v1952
        %s1961 = sand.u32 %s319, 1
        %s1962 = scalar_lea.sflag [#allocation4], %s1961
        %s1963 = sand.u32 %s319, 1
        %s1964 = smul.addr %s1963, 64
        %s1965 = scalar_lea.vmem [#allocation13], %s1964
        // Predicated region
        $region97: #{tpu_custom_call.1} parent=71 // pred_check
          %p1966 = pneg %p329
        $region98: #{tpu_custom_call.1} parent=71 // pred_check_branch
          %1968 = sbr.rel (%p1966) target = $region100
        $region99: #{tpu_custom_call.1} parent=71 // pred_region
          %s1970 = ssub.s32 1024, 1024
          %1971 = vsyncadd %s1962, %s1970
          %s1972 = smul.addr %s33, 8
          %s1973 = smul.addr %s1972, 128
          %s1974 = scalar_lea.hbm %s13, %s1973
          %s1975 = sshll.u32 %s1965, 4
          %s1976 = int_to_ptr.vmem [resolvable:$true] %s1975
          %1981 = dma.vmem_to_hbm [thread:$0]  %s1976, 1024, %s1974, %s1962, 512, 512, 32
        $region100: #{tpu_custom_call.1} parent=71 // pred_fallthru
          _
      $region72: #{tpu_custom_call.1} parent=5 // pred_fallthru
        _
      %p1982 = scmp.le.s32.totalorder 2, %s28
      // Predicated region
      $region101: #{tpu_custom_call.1} parent=5 // pred_check
        %p1983 = pneg %p1982
      $region102: #{tpu_custom_call.1} parent=5 // pred_check_branch
        %1985 = sbr.rel (%p1983) target = $region104
      $region103: #{tpu_custom_call.1} parent=5 // pred_region
        %s1986 = ssub.s32 %s28, 2
        // Predicated region
        $region105: #{tpu_custom_call.1} parent=103 // pred_check
          %p1987 = pneg %p335
        $region106: #{tpu_custom_call.1} parent=103 // pred_check_branch
          %1989 = sbr.rel (%p1987) target = $region108
        $region107: #{tpu_custom_call.1} parent=103 // pred_region
          %s1990 = sand.u32 %s320, 1
          %s1991 = scalar_lea.sflag [#allocation4], %s1990
          %s1992 = sand.u32 %s320, 1
          %s1993 = smul.addr %s1992, 64
          %s1994 = scalar_lea.vmem [#allocation13], %s1993
          %1995 = dma.done %s1991, 1024
        $region108: #{tpu_custom_call.1} parent=103 // pred_fallthru
          _
      $region104: #{tpu_custom_call.1} parent=5 // pred_fallthru
        _
    $region6: #{tpu_custom_call.1} parent=1 // loop_footer
      %s32 = sadd.s32 1, %s28
    $region7: #{tpu_custom_call.1} parent=1 // loop_footer_branch
      %27 = sbr.rel target = $region3
    $region8: #{tpu_custom_call.1} parent=1 // loop_exit
      _
    %1996 = vsyncpa [#allocation3], 1
    %s1997 = scalar_lea.sflag [#allocation3], 1
    %1998 = vsyncpa %s1997, 1
    %1999 = vsyncpa [#allocation6], 1
    %2000 = vsyncpa [#allocation9], 1
    %2001 = vsyncpa [#allocation12], 1
    %2002 = vsyncpa [#allocation4], 1
    %s2003 = scalar_lea.sflag [#allocation4], 1
    %2004 = vsyncpa %s2003, 1

</llo_original>
